<compile_context>
chip_gen: v7x
topology: tpu7x:2x2x1
jax: 0.10.0
libtpu: 0.0.40
codegen_flags: <defaults>
</compile_context>

<pallas_src>
import math

import jax
import jax.numpy as jnp
from jax.experimental import pallas as pl
from jax.experimental.pallas import tpu as pltpu


# ---------------------------------------------------------------------------
# Pallas kernel: exp(-((t - mean) * inv_std_scaled)^2) * coef over a [TM, K] tile.
# ---------------------------------------------------------------------------
def _gaussian_kernel(t_ref, mean_ref, inv_std_ref, coef_ref, o_ref):
    # t_ref:       [TM, 1]  affine-transformed distances (mul * x + bias)
    # mean_ref:    [1,  K]  raw means embedding weight
    # inv_std_ref: [1,  K]  sqrt(0.5) / (|std| + 0.01)   (folds the -0.5)
    # coef_ref:    [1,  K]  1 / (sqrt(2*pi) * (|std| + 0.01))
    # o_ref:       [TM, K]  output tile
    d = (t_ref[...] - mean_ref[...]) * inv_std_ref[...]   # broadcast -> [TM, K]
    o_ref[...] = jnp.exp(-(d * d)) * coef_ref[...]


def gaussian_expand_pallas(t_flat, means_w, inv_std_scaled, coef, *, tm=1024):
    """t_flat: [M, 1] f32; means_w/inv_std_scaled/coef: [1, K] f32 -> [M, K] f32."""
    M = t_flat.shape[0]
    K = means_w.shape[1]
    assert tm % 8 == 0, "row tile must be a multiple of 8 (sublane)"
    assert K % 128 == 0, "K must be a multiple of 128 for lane-dense output"

    n_blocks = pl.cdiv(M, tm)
    m_pad = n_blocks * tm
    if m_pad != M:
        # Tail rows are computed and discarded (cheap vs. a masked store path).
        t_flat = jnp.pad(t_flat, ((0, m_pad - M), (0, 0)))

    # VMEM accounting (double-buffered):
    #   output tiles  : 2 * tm * K * 4 bytes
    #   t tiles       : 2 * tm * 128 * 4 bytes   ([tm,1] pads to full 128 lanes)
    #   [1,K] params  : negligible (padded to [8,K])
    vmem_needed = 2 * tm * K * 4 + 2 * tm * 128 * 4 + 6 * 8 * K * 4
    # Headroom, but stay well under v5e's 16 MiB / v7x's 32 MiB default scoped VMEM.
    vmem_limit = min(max(2 * vmem_needed, 16 * 1024 * 1024), 32 * 1024 * 1024)

    out = pl.pallas_call(
        _gaussian_kernel,
        out_shape=jax.ShapeDtypeStruct((m_pad, K), jnp.float32),
        grid_spec=pltpu.PrefetchScalarGridSpec(
            num_scalar_prefetch=0,
            grid=(n_blocks,),
            in_specs=[
                pl.BlockSpec((tm, 1), lambda i: (i, 0)),   # t rows
                pl.BlockSpec((1, K), lambda i: (0, 0)),    # means (resident)
                pl.BlockSpec((1, K), lambda i: (0, 0)),    # inv_std_scaled (resident)
                pl.BlockSpec((1, K), lambda i: (0, 0)),    # coef (resident)
            ],
            out_specs=pl.BlockSpec((tm, K), lambda i: (i, 0)),
        ),
        compiler_params=pltpu.CompilerParams(
            dimension_semantics=("parallel",),
            vmem_limit_bytes=vmem_limit,
        ),
    )(t_flat, means_w, inv_std_scaled, coef)

    if m_pad != M:
        out = out[:M]
    return out


# ---------------------------------------------------------------------------
# GaussianLayer forward (JAX glue + Pallas hot path)
# ---------------------------------------------------------------------------
class GaussianLayerPallas:
    def __init__(self, K=128, edge_types=512 * 3, key=jax.random.PRNGKey(0), tm=1024):
        self.K = K
        self.tm = tm
        k_means, k_stds = jax.random.split(key)
        # nn.init.uniform_(means.weight, 0, 3); nn.init.uniform_(stds.weight, 0, 3)
        self.means_w = jax.random.uniform(
            k_means, (1, K), dtype=jnp.float32, minval=0.0, maxval=3.0
        )
        self.stds_w = jax.random.uniform(
            k_stds, (1, K), dtype=jnp.float32, minval=0.0, maxval=3.0
        )
        # nn.init.constant_(mul.weight, 1); nn.init.constant_(bias.weight, 0)
        # (constant_ overwrites the padding row too, matching the PyTorch module)
        self.mul_w = jnp.ones((edge_types, 1), dtype=jnp.float32)
        self.bias_w = jnp.zeros((edge_types, 1), dtype=jnp.float32)

    def __call__(self, x, edge_types_idx):
        # x: [B, N, N] f32; edge_types_idx: [B, N, N, E] int32
        B, N1, N2 = x.shape
        # Embedding lookups (feature dim 1) + sum over the edge-type axis (-2)
        mul = jnp.take(self.mul_w, edge_types_idx, axis=0).sum(axis=-2)    # [B,N,N,1]
        bias = jnp.take(self.bias_w, edge_types_idx, axis=0).sum(axis=-2)  # [B,N,N,1]
        t = mul * x[..., None] + bias                                      # [B,N,N,1]
        t_flat = t.reshape(B * N1 * N2, 1).astype(jnp.float32)

        # One-time [1,K] precompute: exact f32 reciprocals, -0.5 folded into the scale.
        std = jnp.abs(self.stds_w) + 0.01                    # [1, K]
        inv_std = 1.0 / std                                  # exact f32 divide, once
        inv_std_scaled = inv_std * jnp.float32(math.sqrt(0.5))
        a = (2.0 * 3.14159) ** 0.5                           # matches torch.jit gaussian()
        coef = inv_std * jnp.float32(1.0 / a)

        out_flat = gaussian_expand_pallas(
            t_flat, self.means_w, inv_std_scaled, coef, tm=self.tm
        )
        # .type_as(means.weight) -> float32
        return out_flat.reshape(B, N1, N2, self.K)


# ---------------------------------------------------------------------------
# Pure-JAX reference (mirror of the torch.jit gaussian + forward)
# ---------------------------------------------------------------------------
def _reference(layer, x, edge_types_idx):
    mul = jnp.take(layer.mul_w, edge_types_idx, axis=0).sum(axis=-2)
    bias = jnp.take(layer.bias_w, edge_types_idx, axis=0).sum(axis=-2)
    t = mul * x[..., None] + bias                        # [B,N,N,1]
    t = jnp.broadcast_to(t, t.shape[:-1] + (layer.K,))   # expand to K
    mean = layer.means_w.reshape(-1)
    std = jnp.abs(layer.stds_w.reshape(-1)) + 0.01
    a = (2.0 * 3.14159) ** 0.5
    return jnp.exp(-0.5 * ((t - mean) / std) ** 2) / (a * std)


if __name__ == "__main__":
    key = jax.random.PRNGKey(0)
    k_param, k_x, k_e = jax.random.split(key, 3)

    B, N, E, K = 2, 12, 3, 128      # M = B*N*N = 288 (exercises the padded tail)
    layer = GaussianLayerPallas(K=K, edge_types=512 * 3, key=k_param, tm=1024)

    x = jax.random.uniform(k_x, (B, N, N), dtype=jnp.float32, minval=0.0, maxval=5.0)
    edge_types_idx = jax.random.randint(k_e, (B, N, N, E), 0, 512 * 3, dtype=jnp.int32)

    ref = _reference(layer, x, edge_types_idx)

    # 1) Production tile (single padded block at this tiny size).
    out = jax.block_until_ready(layer(x, edge_types_idx))
    assert out.shape == (B, N, N, K)
    assert out.dtype == jnp.float32
    assert jnp.allclose(out, ref, atol=1e-5, rtol=1e-5)

    # 2) Small tile to exercise the multi-block grid + tail padding path.
    layer.tm = 64
    out2 = jax.block_until_ready(layer(x, edge_types_idx))
    assert jnp.allclose(out2, ref, atol=1e-5, rtol=1e-5)

    print("KERNEL_OK")
</pallas_src>

<mosaic_0001>
module attributes {stable_mosaic.version = 11 : i64} {
  func.func @_gaussian_kernel(%arg0: i32, %arg1: memref<1024x1xf32, #tpu.memory_space<vmem>>, %arg2: memref<1x128xf32, #tpu.memory_space<vmem>>, %arg3: memref<1x128xf32, #tpu.memory_space<vmem>>, %arg4: memref<1x128xf32, #tpu.memory_space<vmem>>, %arg5: memref<1024x128xf32, #tpu.memory_space<vmem>>) attributes {dimension_semantics = [#tpu.dimension_semantics<parallel>], iteration_bounds = array<i64: 1>, scalar_prefetch = 0 : i64, scratch_operands = 0 : i64, tpu.core_type = #tpu.core_type<tc>, window_params = [{transform_indices = @transform_0, window_bounds = array<i64: 1024, 1>}, {pipeline_mode = #tpu.pipeline_mode<synchronous>, transform_indices = @transform_1, window_bounds = array<i64: 1, 128>}, {pipeline_mode = #tpu.pipeline_mode<synchronous>, transform_indices = @transform_2, window_bounds = array<i64: 1, 128>}, {pipeline_mode = #tpu.pipeline_mode<synchronous>, transform_indices = @transform_3, window_bounds = array<i64: 1, 128>}, {transform_indices = @transform_4, window_bounds = array<i64: 1024, 128>}]} {
    %c0 = arith.constant 0 : index
    %c0_0 = arith.constant 0 : index
    %0 = vector.load %arg1[%c0, %c0_0] : memref<1024x1xf32, #tpu.memory_space<vmem>>, vector<1024x1xf32>
    %c0_1 = arith.constant 0 : index
    %c0_2 = arith.constant 0 : index
    %1 = vector.load %arg2[%c0_1, %c0_2] : memref<1x128xf32, #tpu.memory_space<vmem>>, vector<1x128xf32>
    %2 = vector.broadcast %0 : vector<1024x1xf32> to vector<1024x128xf32>
    %3 = vector.broadcast %1 : vector<1x128xf32> to vector<1024x128xf32>
    %4 = arith.subf %2, %3 : vector<1024x128xf32>
    %c0_3 = arith.constant 0 : index
    %c0_4 = arith.constant 0 : index
    %5 = vector.load %arg3[%c0_3, %c0_4] : memref<1x128xf32, #tpu.memory_space<vmem>>, vector<1x128xf32>
    %6 = vector.broadcast %5 : vector<1x128xf32> to vector<1024x128xf32>
    %7 = arith.mulf %4, %6 : vector<1024x128xf32>
    %8 = arith.mulf %7, %7 : vector<1024x128xf32>
    %cst = arith.constant 0.000000e+00 : f32
    %9 = vector.broadcast %cst : f32 to vector<1024x128xf32>
    %10 = arith.subf %9, %8 : vector<1024x128xf32>
    %11 = math.exp %10 : vector<1024x128xf32>
    %c0_5 = arith.constant 0 : index
    %c0_6 = arith.constant 0 : index
    %12 = vector.load %arg4[%c0_5, %c0_6] : memref<1x128xf32, #tpu.memory_space<vmem>>, vector<1x128xf32>
    %13 = vector.broadcast %12 : vector<1x128xf32> to vector<1024x128xf32>
    %14 = arith.mulf %11, %13 : vector<1024x128xf32>
    %c0_7 = arith.constant 0 : index
    %c0_8 = arith.constant 0 : index
    %15 = vector.load %arg5[%c0_7, %c0_8] : memref<1024x128xf32, #tpu.memory_space<vmem>>, vector<1024x128xf32>
    tpu.vector_store %arg5[%c0_7, %c0_8], %14 {strides = array<i32>} : memref<1024x128xf32, #tpu.memory_space<vmem>>, vector<1024x128xf32>,
    return
  }
  func.func @transform_0(%arg0: i32) -> (i32, i32) {
    %c0_i32 = arith.constant 0 : i32
    %c0_i32_0 = arith.constant 0 : i32
    return %arg0, %c0_i32 : i32, i32
  }
  func.func @transform_1(%arg0: i32) -> (i32, i32) {
    %c0_i32 = arith.constant 0 : i32
    %c0_i32_0 = arith.constant 0 : i32
    %c0_i32_1 = arith.constant 0 : i32
    return %c0_i32, %c0_i32_0 : i32, i32
  }
  func.func @transform_2(%arg0: i32) -> (i32, i32) {
    %c0_i32 = arith.constant 0 : i32
    %c0_i32_0 = arith.constant 0 : i32
    %c0_i32_1 = arith.constant 0 : i32
    return %c0_i32, %c0_i32_0 : i32, i32
  }
  func.func @transform_3(%arg0: i32) -> (i32, i32) {
    %c0_i32 = arith.constant 0 : i32
    %c0_i32_0 = arith.constant 0 : i32
    %c0_i32_1 = arith.constant 0 : i32
    return %c0_i32, %c0_i32_0 : i32, i32
  }
  func.func @transform_4(%arg0: i32) -> (i32, i32) {
    %c0_i32 = arith.constant 0 : i32
    %c0_i32_0 = arith.constant 0 : i32
    return %arg0, %c0_i32 : i32, i32
  }
}

</mosaic_0001>

<llo_original>
// kernel: tpu_custom_call.1
$region0: #{tpu_custom_call.1}
  #allocation0 [shape = 'u32[]', space=smem, size = 0x4, offset = 0x4, fixed_abs, tag = 'smem constant byte address 0x4 - core index']
  #allocation1 [shape = 'u32[144,128]{1,0:T(1,128)}', space=vmem, size = 0x12000, scoped, tag = 'internal scratch']
  %s0 = inlined_call_operand.vmem [shape: f32[1024,1], index: 0, kind: input, shape index: {}]
  %s1 = inlined_call_operand.vmem [shape: f32[1,128], index: 1, kind: input, shape index: {}]
  %s2 = inlined_call_operand.vmem [shape: f32[1,128], index: 2, kind: input, shape index: {}]
  %s3 = inlined_call_operand.vmem [shape: f32[1,128], index: 3, kind: input, shape index: {}]
  %s4 = inlined_call_operand.hbm [shape: f32[1024,128], index: 4, kind: output, shape index: {}]
  %s5 = sld [smem:[#allocation0]]
  $region26: #{tpu_custom_call.1} parent=0
    _
  %s7 = ssub.s32 1, %s5
  %s8 = scalar_select 0, %s7, %s5
  $region1: #{tpu_custom_call.1} parent=0
    #allocation2 [shape = 'u8[524288]{0}', space=vmem, size = 0x80000, scoped, tag = 'output window, operand 0, single buffered']
    #allocation3 [shape = 's32[1]{0}', space=sflag, size = 0x4, scoped, tag = 'scoped memory for tpu_custom_call.1']
    %9 = vsyncpa [#allocation3], 0
    // Predicated region
    $region2: #{tpu_custom_call.1} parent=1 // pred_check
      _
    $region3: #{tpu_custom_call.1} parent=1 // pred_check_branch
      %11 = sbr.rel (0) target = $region5
    $region4: #{tpu_custom_call.1} parent=1 // pred_region
      _
    $region5: #{tpu_custom_call.1} parent=1 // pred_fallthru
      _
    // Predicated region
    $region6: #{tpu_custom_call.1} parent=1 // pred_check
      _
    $region7: #{tpu_custom_call.1} parent=1 // pred_check_branch
      %13 = sbr.rel (0) target = $region9
    $region8: #{tpu_custom_call.1} parent=1 // pred_region
      _
    $region9: #{tpu_custom_call.1} parent=1 // pred_fallthru
      _
    // Predicated region
    $region10: #{tpu_custom_call.1} parent=1 // pred_check
      _
    $region11: #{tpu_custom_call.1} parent=1 // pred_check_branch
      %15 = sbr.rel (0) target = $region13
    $region12: #{tpu_custom_call.1} parent=1 // pred_region
      _
    $region13: #{tpu_custom_call.1} parent=1 // pred_fallthru
      _
    // Predicated region
    $region14: #{tpu_custom_call.1} parent=1 // pred_check
      _
    $region15: #{tpu_custom_call.1} parent=1 // pred_check_branch
      %17 = sbr.rel (0) target = $region17
    $region16: #{tpu_custom_call.1} parent=1 // pred_region
      _
    $region17: #{tpu_custom_call.1} parent=1 // pred_fallthru
      _
    %v18 = vld [vmem:[%s0] sm:$0xff]
    %v19 = vld [vmem:[%s0 + $0x8] sm:$0xff]
    %v20 = vld [vmem:[%s0 + $0x10] sm:$0xff]
    %v21 = vld [vmem:[%s0 + $0x18] sm:$0xff]
    %v22 = vld [vmem:[%s0 + $0x20] sm:$0xff]
    %v23 = vld [vmem:[%s0 + $0x28] sm:$0xff]
    %v24 = vld [vmem:[%s0 + $0x30] sm:$0xff]
    %v25 = vld [vmem:[%s0 + $0x38] sm:$0xff]
    %v26 = vld [vmem:[%s0 + $0x40] sm:$0xff]
    %v27 = vld [vmem:[%s0 + $0x48] sm:$0xff]
    %v28 = vld [vmem:[%s0 + $0x50] sm:$0xff]
    %v29 = vld [vmem:[%s0 + $0x58] sm:$0xff]
    %v30 = vld [vmem:[%s0 + $0x60] sm:$0xff]
    %v31 = vld [vmem:[%s0 + $0x68] sm:$0xff]
    %v32 = vld [vmem:[%s0 + $0x70] sm:$0xff]
    %v33 = vld [vmem:[%s0 + $0x78] sm:$0xff]
    %v34 = vld [vmem:[%s0 + $0x80] sm:$0xff]
    %v35 = vld [vmem:[%s0 + $0x88] sm:$0xff]
    %v36 = vld [vmem:[%s0 + $0x90] sm:$0xff]
    %v37 = vld [vmem:[%s0 + $0x98] sm:$0xff]
    %v38 = vld [vmem:[%s0 + $0xa0] sm:$0xff]
    %v39 = vld [vmem:[%s0 + $0xa8] sm:$0xff]
    %v40 = vld [vmem:[%s0 + $0xb0] sm:$0xff]
    %v41 = vld [vmem:[%s0 + $0xb8] sm:$0xff]
    %v42 = vld [vmem:[%s0 + $0xc0] sm:$0xff]
    %v43 = vld [vmem:[%s0 + $0xc8] sm:$0xff]
    %v44 = vld [vmem:[%s0 + $0xd0] sm:$0xff]
    %v45 = vld [vmem:[%s0 + $0xd8] sm:$0xff]
    %v46 = vld [vmem:[%s0 + $0xe0] sm:$0xff]
    %v47 = vld [vmem:[%s0 + $0xe8] sm:$0xff]
    %v48 = vld [vmem:[%s0 + $0xf0] sm:$0xff]
    %v49 = vld [vmem:[%s0 + $0xf8] sm:$0xff]
    %v50 = vld [vmem:[%s0 + $0x100] sm:$0xff]
    %v51 = vld [vmem:[%s0 + $0x108] sm:$0xff]
    %v52 = vld [vmem:[%s0 + $0x110] sm:$0xff]
    %v53 = vld [vmem:[%s0 + $0x118] sm:$0xff]
    %v54 = vld [vmem:[%s0 + $0x120] sm:$0xff]
    %v55 = vld [vmem:[%s0 + $0x128] sm:$0xff]
    %v56 = vld [vmem:[%s0 + $0x130] sm:$0xff]
    %v57 = vld [vmem:[%s0 + $0x138] sm:$0xff]
    %v58 = vld [vmem:[%s0 + $0x140] sm:$0xff]
    %v59 = vld [vmem:[%s0 + $0x148] sm:$0xff]
    %v60 = vld [vmem:[%s0 + $0x150] sm:$0xff]
    %v61 = vld [vmem:[%s0 + $0x158] sm:$0xff]
    %v62 = vld [vmem:[%s0 + $0x160] sm:$0xff]
    %v63 = vld [vmem:[%s0 + $0x168] sm:$0xff]
    %v64 = vld [vmem:[%s0 + $0x170] sm:$0xff]
    %v65 = vld [vmem:[%s0 + $0x178] sm:$0xff]
    %v66 = vld [vmem:[%s0 + $0x180] sm:$0xff]
    %v67 = vld [vmem:[%s0 + $0x188] sm:$0xff]
    %v68 = vld [vmem:[%s0 + $0x190] sm:$0xff]
    %v69 = vld [vmem:[%s0 + $0x198] sm:$0xff]
    %v70 = vld [vmem:[%s0 + $0x1a0] sm:$0xff]
    %v71 = vld [vmem:[%s0 + $0x1a8] sm:$0xff]
    %v72 = vld [vmem:[%s0 + $0x1b0] sm:$0xff]
    %v73 = vld [vmem:[%s0 + $0x1b8] sm:$0xff]
    %v74 = vld [vmem:[%s0 + $0x1c0] sm:$0xff]
    %v75 = vld [vmem:[%s0 + $0x1c8] sm:$0xff]
    %v76 = vld [vmem:[%s0 + $0x1d0] sm:$0xff]
    %v77 = vld [vmem:[%s0 + $0x1d8] sm:$0xff]
    %v78 = vld [vmem:[%s0 + $0x1e0] sm:$0xff]
    %v79 = vld [vmem:[%s0 + $0x1e8] sm:$0xff]
    %v80 = vld [vmem:[%s0 + $0x1f0] sm:$0xff]
    %v81 = vld [vmem:[%s0 + $0x1f8] sm:$0xff]
    %v82 = vld [vmem:[%s0 + $0x200] sm:$0xff]
    %v83 = vld [vmem:[%s0 + $0x208] sm:$0xff]
    %v84 = vld [vmem:[%s0 + $0x210] sm:$0xff]
    %v85 = vld [vmem:[%s0 + $0x218] sm:$0xff]
    %v86 = vld [vmem:[%s0 + $0x220] sm:$0xff]
    %v87 = vld [vmem:[%s0 + $0x228] sm:$0xff]
    %v88 = vld [vmem:[%s0 + $0x230] sm:$0xff]
    %v89 = vld [vmem:[%s0 + $0x238] sm:$0xff]
    %v90 = vld [vmem:[%s0 + $0x240] sm:$0xff]
    %v91 = vld [vmem:[%s0 + $0x248] sm:$0xff]
    %v92 = vld [vmem:[%s0 + $0x250] sm:$0xff]
    %v93 = vld [vmem:[%s0 + $0x258] sm:$0xff]
    %v94 = vld [vmem:[%s0 + $0x260] sm:$0xff]
    %v95 = vld [vmem:[%s0 + $0x268] sm:$0xff]
    %v96 = vld [vmem:[%s0 + $0x270] sm:$0xff]
    %v97 = vld [vmem:[%s0 + $0x278] sm:$0xff]
    %v98 = vld [vmem:[%s0 + $0x280] sm:$0xff]
    %v99 = vld [vmem:[%s0 + $0x288] sm:$0xff]
    %v100 = vld [vmem:[%s0 + $0x290] sm:$0xff]
    %v101 = vld [vmem:[%s0 + $0x298] sm:$0xff]
    %v102 = vld [vmem:[%s0 + $0x2a0] sm:$0xff]
    %v103 = vld [vmem:[%s0 + $0x2a8] sm:$0xff]
    %v104 = vld [vmem:[%s0 + $0x2b0] sm:$0xff]
    %v105 = vld [vmem:[%s0 + $0x2b8] sm:$0xff]
    %v106 = vld [vmem:[%s0 + $0x2c0] sm:$0xff]
    %v107 = vld [vmem:[%s0 + $0x2c8] sm:$0xff]
    %v108 = vld [vmem:[%s0 + $0x2d0] sm:$0xff]
    %v109 = vld [vmem:[%s0 + $0x2d8] sm:$0xff]
    %v110 = vld [vmem:[%s0 + $0x2e0] sm:$0xff]
    %v111 = vld [vmem:[%s0 + $0x2e8] sm:$0xff]
    %v112 = vld [vmem:[%s0 + $0x2f0] sm:$0xff]
    %v113 = vld [vmem:[%s0 + $0x2f8] sm:$0xff]
    %v114 = vld [vmem:[%s0 + $0x300] sm:$0xff]
    %v115 = vld [vmem:[%s0 + $0x308] sm:$0xff]
    %v116 = vld [vmem:[%s0 + $0x310] sm:$0xff]
    %v117 = vld [vmem:[%s0 + $0x318] sm:$0xff]
    %v118 = vld [vmem:[%s0 + $0x320] sm:$0xff]
    %v119 = vld [vmem:[%s0 + $0x328] sm:$0xff]
    %v120 = vld [vmem:[%s0 + $0x330] sm:$0xff]
    %v121 = vld [vmem:[%s0 + $0x338] sm:$0xff]
    %v122 = vld [vmem:[%s0 + $0x340] sm:$0xff]
    %v123 = vld [vmem:[%s0 + $0x348] sm:$0xff]
    %v124 = vld [vmem:[%s0 + $0x350] sm:$0xff]
    %v125 = vld [vmem:[%s0 + $0x358] sm:$0xff]
    %v126 = vld [vmem:[%s0 + $0x360] sm:$0xff]
    %v127 = vld [vmem:[%s0 + $0x368] sm:$0xff]
    %v128 = vld [vmem:[%s0 + $0x370] sm:$0xff]
    %v129 = vld [vmem:[%s0 + $0x378] sm:$0xff]
    %v130 = vld [vmem:[%s0 + $0x380] sm:$0xff]
    %v131 = vld [vmem:[%s0 + $0x388] sm:$0xff]
    %v132 = vld [vmem:[%s0 + $0x390] sm:$0xff]
    %v133 = vld [vmem:[%s0 + $0x398] sm:$0xff]
    %v134 = vld [vmem:[%s0 + $0x3a0] sm:$0xff]
    %v135 = vld [vmem:[%s0 + $0x3a8] sm:$0xff]
    %v136 = vld [vmem:[%s0 + $0x3b0] sm:$0xff]
    %v137 = vld [vmem:[%s0 + $0x3b8] sm:$0xff]
    %v138 = vld [vmem:[%s0 + $0x3c0] sm:$0xff]
    %v139 = vld [vmem:[%s0 + $0x3c8] sm:$0xff]
    %v140 = vld [vmem:[%s0 + $0x3d0] sm:$0xff]
    %v141 = vld [vmem:[%s0 + $0x3d8] sm:$0xff]
    %v142 = vld [vmem:[%s0 + $0x3e0] sm:$0xff]
    %v143 = vld [vmem:[%s0 + $0x3e8] sm:$0xff]
    %v144 = vld [vmem:[%s0 + $0x3f0] sm:$0xff]
    %v145 = vld [vmem:[%s0 + $0x3f8] sm:$0xff]
    %v146 = vld [vmem:[%s1] sm:$0x1]
    %148 = vset.pattern.permute.xlu0 0
    %149 = vperm.xlu0 %148, %v18
    %v150 = vpop.permute.xlu0 %149
    %153 = vset.pattern.permute.xlu0 0
    %154 = vperm.xlu0 %153, %v19
    %v155 = vpop.permute.xlu0 %154
    %158 = vset.pattern.permute.xlu0 0
    %159 = vperm.xlu0 %158, %v20
    %v160 = vpop.permute.xlu0 %159
    %163 = vset.pattern.permute.xlu0 0
    %164 = vperm.xlu0 %163, %v21
    %v165 = vpop.permute.xlu0 %164
    %168 = vset.pattern.permute.xlu0 0
    %169 = vperm.xlu0 %168, %v22
    %v170 = vpop.permute.xlu0 %169
    %173 = vset.pattern.permute.xlu0 0
    %174 = vperm.xlu0 %173, %v23
    %v175 = vpop.permute.xlu0 %174
    %178 = vset.pattern.permute.xlu0 0
    %179 = vperm.xlu0 %178, %v24
    %v180 = vpop.permute.xlu0 %179
    %183 = vset.pattern.permute.xlu0 0
    %184 = vperm.xlu0 %183, %v25
    %v185 = vpop.permute.xlu0 %184
    %188 = vset.pattern.permute.xlu0 0
    %189 = vperm.xlu0 %188, %v26
    %v190 = vpop.permute.xlu0 %189
    %193 = vset.pattern.permute.xlu0 0
    %194 = vperm.xlu0 %193, %v27
    %v195 = vpop.permute.xlu0 %194
    %198 = vset.pattern.permute.xlu0 0
    %199 = vperm.xlu0 %198, %v28
    %v200 = vpop.permute.xlu0 %199
    %203 = vset.pattern.permute.xlu0 0
    %204 = vperm.xlu0 %203, %v29
    %v205 = vpop.permute.xlu0 %204
    %208 = vset.pattern.permute.xlu0 0
    %209 = vperm.xlu0 %208, %v30
    %v210 = vpop.permute.xlu0 %209
    %213 = vset.pattern.permute.xlu0 0
    %214 = vperm.xlu0 %213, %v31
    %v215 = vpop.permute.xlu0 %214
    %218 = vset.pattern.permute.xlu0 0
    %219 = vperm.xlu0 %218, %v32
    %v220 = vpop.permute.xlu0 %219
    %223 = vset.pattern.permute.xlu0 0
    %224 = vperm.xlu0 %223, %v33
    %v225 = vpop.permute.xlu0 %224
    %228 = vset.pattern.permute.xlu0 0
    %229 = vperm.xlu0 %228, %v34
    %v230 = vpop.permute.xlu0 %229
    %233 = vset.pattern.permute.xlu0 0
    %234 = vperm.xlu0 %233, %v35
    %v235 = vpop.permute.xlu0 %234
    %238 = vset.pattern.permute.xlu0 0
    %239 = vperm.xlu0 %238, %v36
    %v240 = vpop.permute.xlu0 %239
    %243 = vset.pattern.permute.xlu0 0
    %244 = vperm.xlu0 %243, %v37
    %v245 = vpop.permute.xlu0 %244
    %248 = vset.pattern.permute.xlu0 0
    %249 = vperm.xlu0 %248, %v38
    %v250 = vpop.permute.xlu0 %249
    %253 = vset.pattern.permute.xlu0 0
    %254 = vperm.xlu0 %253, %v39
    %v255 = vpop.permute.xlu0 %254
    %258 = vset.pattern.permute.xlu0 0
    %259 = vperm.xlu0 %258, %v40
    %v260 = vpop.permute.xlu0 %259
    %263 = vset.pattern.permute.xlu0 0
    %264 = vperm.xlu0 %263, %v41
    %v265 = vpop.permute.xlu0 %264
    %268 = vset.pattern.permute.xlu0 0
    %269 = vperm.xlu0 %268, %v42
    %v270 = vpop.permute.xlu0 %269
    %273 = vset.pattern.permute.xlu0 0
    %274 = vperm.xlu0 %273, %v43
    %v275 = vpop.permute.xlu0 %274
    %278 = vset.pattern.permute.xlu0 0
    %279 = vperm.xlu0 %278, %v44
    %v280 = vpop.permute.xlu0 %279
    %283 = vset.pattern.permute.xlu0 0
    %284 = vperm.xlu0 %283, %v45
    %v285 = vpop.permute.xlu0 %284
    %288 = vset.pattern.permute.xlu0 0
    %289 = vperm.xlu0 %288, %v46
    %v290 = vpop.permute.xlu0 %289
    %293 = vset.pattern.permute.xlu0 0
    %294 = vperm.xlu0 %293, %v47
    %v295 = vpop.permute.xlu0 %294
    %298 = vset.pattern.permute.xlu0 0
    %299 = vperm.xlu0 %298, %v48
    %v300 = vpop.permute.xlu0 %299
    %303 = vset.pattern.permute.xlu0 0
    %304 = vperm.xlu0 %303, %v49
    %v305 = vpop.permute.xlu0 %304
    %308 = vset.pattern.permute.xlu0 0
    %309 = vperm.xlu0 %308, %v50
    %v310 = vpop.permute.xlu0 %309
    %313 = vset.pattern.permute.xlu0 0
    %314 = vperm.xlu0 %313, %v51
    %v315 = vpop.permute.xlu0 %314
    %318 = vset.pattern.permute.xlu0 0
    %319 = vperm.xlu0 %318, %v52
    %v320 = vpop.permute.xlu0 %319
    %323 = vset.pattern.permute.xlu0 0
    %324 = vperm.xlu0 %323, %v53
    %v325 = vpop.permute.xlu0 %324
    %328 = vset.pattern.permute.xlu0 0
    %329 = vperm.xlu0 %328, %v54
    %v330 = vpop.permute.xlu0 %329
    %333 = vset.pattern.permute.xlu0 0
    %334 = vperm.xlu0 %333, %v55
    %v335 = vpop.permute.xlu0 %334
    %338 = vset.pattern.permute.xlu0 0
    %339 = vperm.xlu0 %338, %v56
    %v340 = vpop.permute.xlu0 %339
    %343 = vset.pattern.permute.xlu0 0
    %344 = vperm.xlu0 %343, %v57
    %v345 = vpop.permute.xlu0 %344
    %348 = vset.pattern.permute.xlu0 0
    %349 = vperm.xlu0 %348, %v58
    %v350 = vpop.permute.xlu0 %349
    %353 = vset.pattern.permute.xlu0 0
    %354 = vperm.xlu0 %353, %v59
    %v355 = vpop.permute.xlu0 %354
    %358 = vset.pattern.permute.xlu0 0
    %359 = vperm.xlu0 %358, %v60
    %v360 = vpop.permute.xlu0 %359
    %363 = vset.pattern.permute.xlu0 0
    %364 = vperm.xlu0 %363, %v61
    %v365 = vpop.permute.xlu0 %364
    %368 = vset.pattern.permute.xlu0 0
    %369 = vperm.xlu0 %368, %v62
    %v370 = vpop.permute.xlu0 %369
    %373 = vset.pattern.permute.xlu0 0
    %374 = vperm.xlu0 %373, %v63
    %v375 = vpop.permute.xlu0 %374
    %378 = vset.pattern.permute.xlu0 0
    %379 = vperm.xlu0 %378, %v64
    %v380 = vpop.permute.xlu0 %379
    %383 = vset.pattern.permute.xlu0 0
    %384 = vperm.xlu0 %383, %v65
    %v385 = vpop.permute.xlu0 %384
    %388 = vset.pattern.permute.xlu0 0
    %389 = vperm.xlu0 %388, %v66
    %v390 = vpop.permute.xlu0 %389
    %393 = vset.pattern.permute.xlu0 0
    %394 = vperm.xlu0 %393, %v67
    %v395 = vpop.permute.xlu0 %394
    %398 = vset.pattern.permute.xlu0 0
    %399 = vperm.xlu0 %398, %v68
    %v400 = vpop.permute.xlu0 %399
    %403 = vset.pattern.permute.xlu0 0
    %404 = vperm.xlu0 %403, %v69
    %v405 = vpop.permute.xlu0 %404
    %408 = vset.pattern.permute.xlu0 0
    %409 = vperm.xlu0 %408, %v70
    %v410 = vpop.permute.xlu0 %409
    %413 = vset.pattern.permute.xlu0 0
    %414 = vperm.xlu0 %413, %v71
    %v415 = vpop.permute.xlu0 %414
    %418 = vset.pattern.permute.xlu0 0
    %419 = vperm.xlu0 %418, %v72
    %v420 = vpop.permute.xlu0 %419
    %423 = vset.pattern.permute.xlu0 0
    %424 = vperm.xlu0 %423, %v73
    %v425 = vpop.permute.xlu0 %424
    %428 = vset.pattern.permute.xlu0 0
    %429 = vperm.xlu0 %428, %v74
    %v430 = vpop.permute.xlu0 %429
    %433 = vset.pattern.permute.xlu0 0
    %434 = vperm.xlu0 %433, %v75
    %v435 = vpop.permute.xlu0 %434
    %438 = vset.pattern.permute.xlu0 0
    %439 = vperm.xlu0 %438, %v76
    %v440 = vpop.permute.xlu0 %439
    %443 = vset.pattern.permute.xlu0 0
    %444 = vperm.xlu0 %443, %v77
    %v445 = vpop.permute.xlu0 %444
    %448 = vset.pattern.permute.xlu0 0
    %449 = vperm.xlu0 %448, %v78
    %v450 = vpop.permute.xlu0 %449
    %453 = vset.pattern.permute.xlu0 0
    %454 = vperm.xlu0 %453, %v79
    %v455 = vpop.permute.xlu0 %454
    %458 = vset.pattern.permute.xlu0 0
    %459 = vperm.xlu0 %458, %v80
    %v460 = vpop.permute.xlu0 %459
    %463 = vset.pattern.permute.xlu0 0
    %464 = vperm.xlu0 %463, %v81
    %v465 = vpop.permute.xlu0 %464
    %468 = vset.pattern.permute.xlu0 0
    %469 = vperm.xlu0 %468, %v82
    %v470 = vpop.permute.xlu0 %469
    %473 = vset.pattern.permute.xlu0 0
    %474 = vperm.xlu0 %473, %v83
    %v475 = vpop.permute.xlu0 %474
    %478 = vset.pattern.permute.xlu0 0
    %479 = vperm.xlu0 %478, %v84
    %v480 = vpop.permute.xlu0 %479
    %483 = vset.pattern.permute.xlu0 0
    %484 = vperm.xlu0 %483, %v85
    %v485 = vpop.permute.xlu0 %484
    %488 = vset.pattern.permute.xlu0 0
    %489 = vperm.xlu0 %488, %v86
    %v490 = vpop.permute.xlu0 %489
    %493 = vset.pattern.permute.xlu0 0
    %494 = vperm.xlu0 %493, %v87
    %v495 = vpop.permute.xlu0 %494
    %498 = vset.pattern.permute.xlu0 0
    %499 = vperm.xlu0 %498, %v88
    %v500 = vpop.permute.xlu0 %499
    %503 = vset.pattern.permute.xlu0 0
    %504 = vperm.xlu0 %503, %v89
    %v505 = vpop.permute.xlu0 %504
    %508 = vset.pattern.permute.xlu0 0
    %509 = vperm.xlu0 %508, %v90
    %v510 = vpop.permute.xlu0 %509
    %513 = vset.pattern.permute.xlu0 0
    %514 = vperm.xlu0 %513, %v91
    %v515 = vpop.permute.xlu0 %514
    %518 = vset.pattern.permute.xlu0 0
    %519 = vperm.xlu0 %518, %v92
    %v520 = vpop.permute.xlu0 %519
    %523 = vset.pattern.permute.xlu0 0
    %524 = vperm.xlu0 %523, %v93
    %v525 = vpop.permute.xlu0 %524
    %528 = vset.pattern.permute.xlu0 0
    %529 = vperm.xlu0 %528, %v94
    %v530 = vpop.permute.xlu0 %529
    %533 = vset.pattern.permute.xlu0 0
    %534 = vperm.xlu0 %533, %v95
    %v535 = vpop.permute.xlu0 %534
    %538 = vset.pattern.permute.xlu0 0
    %539 = vperm.xlu0 %538, %v96
    %v540 = vpop.permute.xlu0 %539
    %543 = vset.pattern.permute.xlu0 0
    %544 = vperm.xlu0 %543, %v97
    %v545 = vpop.permute.xlu0 %544
    %548 = vset.pattern.permute.xlu0 0
    %549 = vperm.xlu0 %548, %v98
    %v550 = vpop.permute.xlu0 %549
    %553 = vset.pattern.permute.xlu0 0
    %554 = vperm.xlu0 %553, %v99
    %v555 = vpop.permute.xlu0 %554
    %558 = vset.pattern.permute.xlu0 0
    %559 = vperm.xlu0 %558, %v100
    %v560 = vpop.permute.xlu0 %559
    %563 = vset.pattern.permute.xlu0 0
    %564 = vperm.xlu0 %563, %v101
    %v565 = vpop.permute.xlu0 %564
    %568 = vset.pattern.permute.xlu0 0
    %569 = vperm.xlu0 %568, %v102
    %v570 = vpop.permute.xlu0 %569
    %573 = vset.pattern.permute.xlu0 0
    %574 = vperm.xlu0 %573, %v103
    %v575 = vpop.permute.xlu0 %574
    %578 = vset.pattern.permute.xlu0 0
    %579 = vperm.xlu0 %578, %v104
    %v580 = vpop.permute.xlu0 %579
    %583 = vset.pattern.permute.xlu0 0
    %584 = vperm.xlu0 %583, %v105
    %v585 = vpop.permute.xlu0 %584
    %588 = vset.pattern.permute.xlu0 0
    %589 = vperm.xlu0 %588, %v106
    %v590 = vpop.permute.xlu0 %589
    %593 = vset.pattern.permute.xlu0 0
    %594 = vperm.xlu0 %593, %v107
    %v595 = vpop.permute.xlu0 %594
    %598 = vset.pattern.permute.xlu0 0
    %599 = vperm.xlu0 %598, %v108
    %v600 = vpop.permute.xlu0 %599
    %603 = vset.pattern.permute.xlu0 0
    %604 = vperm.xlu0 %603, %v109
    %v605 = vpop.permute.xlu0 %604
    %608 = vset.pattern.permute.xlu0 0
    %609 = vperm.xlu0 %608, %v110
    %v610 = vpop.permute.xlu0 %609
    %613 = vset.pattern.permute.xlu0 0
    %614 = vperm.xlu0 %613, %v111
    %v615 = vpop.permute.xlu0 %614
    %618 = vset.pattern.permute.xlu0 0
    %619 = vperm.xlu0 %618, %v112
    %v620 = vpop.permute.xlu0 %619
    %623 = vset.pattern.permute.xlu0 0
    %624 = vperm.xlu0 %623, %v113
    %v625 = vpop.permute.xlu0 %624
    %628 = vset.pattern.permute.xlu0 0
    %629 = vperm.xlu0 %628, %v114
    %v630 = vpop.permute.xlu0 %629
    %633 = vset.pattern.permute.xlu0 0
    %634 = vperm.xlu0 %633, %v115
    %v635 = vpop.permute.xlu0 %634
    %638 = vset.pattern.permute.xlu0 0
    %639 = vperm.xlu0 %638, %v116
    %v640 = vpop.permute.xlu0 %639
    %643 = vset.pattern.permute.xlu0 0
    %644 = vperm.xlu0 %643, %v117
    %v645 = vpop.permute.xlu0 %644
    %648 = vset.pattern.permute.xlu0 0
    %649 = vperm.xlu0 %648, %v118
    %v650 = vpop.permute.xlu0 %649
    %653 = vset.pattern.permute.xlu0 0
    %654 = vperm.xlu0 %653, %v119
    %v655 = vpop.permute.xlu0 %654
    %658 = vset.pattern.permute.xlu0 0
    %659 = vperm.xlu0 %658, %v120
    %v660 = vpop.permute.xlu0 %659
    %663 = vset.pattern.permute.xlu0 0
    %664 = vperm.xlu0 %663, %v121
    %v665 = vpop.permute.xlu0 %664
    %668 = vset.pattern.permute.xlu0 0
    %669 = vperm.xlu0 %668, %v122
    %v670 = vpop.permute.xlu0 %669
    %673 = vset.pattern.permute.xlu0 0
    %674 = vperm.xlu0 %673, %v123
    %v675 = vpop.permute.xlu0 %674
    %678 = vset.pattern.permute.xlu0 0
    %679 = vperm.xlu0 %678, %v124
    %v680 = vpop.permute.xlu0 %679
    %683 = vset.pattern.permute.xlu0 0
    %684 = vperm.xlu0 %683, %v125
    %v685 = vpop.permute.xlu0 %684
    %688 = vset.pattern.permute.xlu0 0
    %689 = vperm.xlu0 %688, %v126
    %v690 = vpop.permute.xlu0 %689
    %693 = vset.pattern.permute.xlu0 0
    %694 = vperm.xlu0 %693, %v127
    %v695 = vpop.permute.xlu0 %694
    %698 = vset.pattern.permute.xlu0 0
    %699 = vperm.xlu0 %698, %v128
    %v700 = vpop.permute.xlu0 %699
    %703 = vset.pattern.permute.xlu0 0
    %704 = vperm.xlu0 %703, %v129
    %v705 = vpop.permute.xlu0 %704
    %708 = vset.pattern.permute.xlu0 0
    %709 = vperm.xlu0 %708, %v130
    %v710 = vpop.permute.xlu0 %709
    %713 = vset.pattern.permute.xlu0 0
    %714 = vperm.xlu0 %713, %v131
    %v715 = vpop.permute.xlu0 %714
    %718 = vset.pattern.permute.xlu0 0
    %719 = vperm.xlu0 %718, %v132
    %v720 = vpop.permute.xlu0 %719
    %723 = vset.pattern.permute.xlu0 0
    %724 = vperm.xlu0 %723, %v133
    %v725 = vpop.permute.xlu0 %724
    %728 = vset.pattern.permute.xlu0 0
    %729 = vperm.xlu0 %728, %v134
    %v730 = vpop.permute.xlu0 %729
    %733 = vset.pattern.permute.xlu0 0
    %734 = vperm.xlu0 %733, %v135
    %v735 = vpop.permute.xlu0 %734
    %738 = vset.pattern.permute.xlu0 0
    %739 = vperm.xlu0 %738, %v136
    %v740 = vpop.permute.xlu0 %739
    %743 = vset.pattern.permute.xlu0 0
    %744 = vperm.xlu0 %743, %v137
    %v745 = vpop.permute.xlu0 %744
    %748 = vset.pattern.permute.xlu0 0
    %749 = vperm.xlu0 %748, %v138
    %v750 = vpop.permute.xlu0 %749
    %753 = vset.pattern.permute.xlu0 0
    %754 = vperm.xlu0 %753, %v139
    %v755 = vpop.permute.xlu0 %754
    %758 = vset.pattern.permute.xlu0 0
    %759 = vperm.xlu0 %758, %v140
    %v760 = vpop.permute.xlu0 %759
    %763 = vset.pattern.permute.xlu0 0
    %764 = vperm.xlu0 %763, %v141
    %v765 = vpop.permute.xlu0 %764
    %768 = vset.pattern.permute.xlu0 0
    %769 = vperm.xlu0 %768, %v142
    %v770 = vpop.permute.xlu0 %769
    %773 = vset.pattern.permute.xlu0 0
    %774 = vperm.xlu0 %773, %v143
    %v775 = vpop.permute.xlu0 %774
    %778 = vset.pattern.permute.xlu0 0
    %779 = vperm.xlu0 %778, %v144
    %v780 = vpop.permute.xlu0 %779
    %783 = vset.pattern.permute.xlu0 0
    %784 = vperm.xlu0 %783, %v145
    %v785 = vpop.permute.xlu0 %784
    %v788 = vlaneseq
    %v789 = vshrl.u32 %v788, 7
    %v790 = vsub.s32 0, %v789
    %v791 = vrot.slane %v146, %v790
    %v793 = vsub.f32 %v150, %v791
    %v794 = vsub.f32 %v155, %v791
    %v795 = vsub.f32 %v160, %v791
    %v796 = vsub.f32 %v165, %v791
    %v797 = vsub.f32 %v170, %v791
    %v798 = vsub.f32 %v175, %v791
    %v799 = vsub.f32 %v180, %v791
    %v800 = vsub.f32 %v185, %v791
    %v801 = vsub.f32 %v190, %v791
    %v802 = vsub.f32 %v195, %v791
    %v803 = vsub.f32 %v200, %v791
    %v804 = vsub.f32 %v205, %v791
    %v805 = vsub.f32 %v210, %v791
    %v806 = vsub.f32 %v215, %v791
    %v807 = vsub.f32 %v220, %v791
    %v808 = vsub.f32 %v225, %v791
    %v809 = vsub.f32 %v230, %v791
    %v810 = vsub.f32 %v235, %v791
    %v811 = vsub.f32 %v240, %v791
    %v812 = vsub.f32 %v245, %v791
    %v813 = vsub.f32 %v250, %v791
    %v814 = vsub.f32 %v255, %v791
    %v815 = vsub.f32 %v260, %v791
    %v816 = vsub.f32 %v265, %v791
    %v817 = vsub.f32 %v270, %v791
    %v818 = vsub.f32 %v275, %v791
    %v819 = vsub.f32 %v280, %v791
    %v820 = vsub.f32 %v285, %v791
    %v821 = vsub.f32 %v290, %v791
    %v822 = vsub.f32 %v295, %v791
    %v823 = vsub.f32 %v300, %v791
    %v824 = vsub.f32 %v305, %v791
    %v825 = vsub.f32 %v310, %v791
    %v826 = vsub.f32 %v315, %v791
    %v827 = vsub.f32 %v320, %v791
    %v828 = vsub.f32 %v325, %v791
    %v829 = vsub.f32 %v330, %v791
    %v830 = vsub.f32 %v335, %v791
    %v831 = vsub.f32 %v340, %v791
    %v832 = vsub.f32 %v345, %v791
    %v833 = vsub.f32 %v350, %v791
    %v834 = vsub.f32 %v355, %v791
    %v835 = vsub.f32 %v360, %v791
    %v836 = vsub.f32 %v365, %v791
    %v837 = vsub.f32 %v370, %v791
    %v838 = vsub.f32 %v375, %v791
    %v839 = vsub.f32 %v380, %v791
    %v840 = vsub.f32 %v385, %v791
    %v841 = vsub.f32 %v390, %v791
    %v842 = vsub.f32 %v395, %v791
    %v843 = vsub.f32 %v400, %v791
    %v844 = vsub.f32 %v405, %v791
    %v845 = vsub.f32 %v410, %v791
    %v846 = vsub.f32 %v415, %v791
    %v847 = vsub.f32 %v420, %v791
    %v848 = vsub.f32 %v425, %v791
    %v849 = vsub.f32 %v430, %v791
    %v850 = vsub.f32 %v435, %v791
    %v851 = vsub.f32 %v440, %v791
    %v852 = vsub.f32 %v445, %v791
    %v853 = vsub.f32 %v450, %v791
    %v854 = vsub.f32 %v455, %v791
    %v855 = vsub.f32 %v460, %v791
    %v856 = vsub.f32 %v465, %v791
    %v857 = vsub.f32 %v470, %v791
    %v858 = vsub.f32 %v475, %v791
    %v859 = vsub.f32 %v480, %v791
    %v860 = vsub.f32 %v485, %v791
    %v861 = vsub.f32 %v490, %v791
    %v862 = vsub.f32 %v495, %v791
    %v863 = vsub.f32 %v500, %v791
    %v864 = vsub.f32 %v505, %v791
    %v865 = vsub.f32 %v510, %v791
    %v866 = vsub.f32 %v515, %v791
    %v867 = vsub.f32 %v520, %v791
    %v868 = vsub.f32 %v525, %v791
    %v869 = vsub.f32 %v530, %v791
    %v870 = vsub.f32 %v535, %v791
    %v871 = vsub.f32 %v540, %v791
    %v872 = vsub.f32 %v545, %v791
    %v873 = vsub.f32 %v550, %v791
    %v874 = vsub.f32 %v555, %v791
    %v875 = vsub.f32 %v560, %v791
    %v876 = vsub.f32 %v565, %v791
    %v877 = vsub.f32 %v570, %v791
    %v878 = vsub.f32 %v575, %v791
    %v879 = vsub.f32 %v580, %v791
    %v880 = vsub.f32 %v585, %v791
    %v881 = vsub.f32 %v590, %v791
    %v882 = vsub.f32 %v595, %v791
    %v883 = vsub.f32 %v600, %v791
    %v884 = vsub.f32 %v605, %v791
    %v885 = vsub.f32 %v610, %v791
    %v886 = vsub.f32 %v615, %v791
    %v887 = vsub.f32 %v620, %v791
    %v888 = vsub.f32 %v625, %v791
    %v889 = vsub.f32 %v630, %v791
    %v890 = vsub.f32 %v635, %v791
    %v891 = vsub.f32 %v640, %v791
    %v892 = vsub.f32 %v645, %v791
    %v893 = vsub.f32 %v650, %v791
    %v894 = vsub.f32 %v655, %v791
    %v895 = vsub.f32 %v660, %v791
    %v896 = vsub.f32 %v665, %v791
    %v897 = vsub.f32 %v670, %v791
    %v898 = vsub.f32 %v675, %v791
    %v899 = vsub.f32 %v680, %v791
    %v900 = vsub.f32 %v685, %v791
    %v901 = vsub.f32 %v690, %v791
    %v902 = vsub.f32 %v695, %v791
    %v903 = vsub.f32 %v700, %v791
    %v904 = vsub.f32 %v705, %v791
    %v905 = vsub.f32 %v710, %v791
    %v906 = vsub.f32 %v715, %v791
    %v907 = vsub.f32 %v720, %v791
    %v908 = vsub.f32 %v725, %v791
    %v909 = vsub.f32 %v730, %v791
    %v910 = vsub.f32 %v735, %v791
    %v911 = vsub.f32 %v740, %v791
    %v912 = vsub.f32 %v745, %v791
    %v913 = vsub.f32 %v750, %v791
    %v914 = vsub.f32 %v755, %v791
    %v915 = vsub.f32 %v760, %v791
    %v916 = vsub.f32 %v765, %v791
    %v917 = vsub.f32 %v770, %v791
    %v918 = vsub.f32 %v775, %v791
    %v919 = vsub.f32 %v780, %v791
    %v920 = vsub.f32 %v785, %v791
    %v921 = vld [vmem:[%s2] sm:$0x1]
    %v923 = vlaneseq
    %v924 = vshrl.u32 %v923, 7
    %v925 = vsub.s32 0, %v924
    %v926 = vrot.slane %v921, %v925
    %v928 = vmul.f32 %v793, %v926
    %v929 = vmul.f32 %v794, %v926
    %v930 = vmul.f32 %v795, %v926
    %v931 = vmul.f32 %v796, %v926
    %v932 = vmul.f32 %v797, %v926
    %v933 = vmul.f32 %v798, %v926
    %v934 = vmul.f32 %v799, %v926
    %v935 = vmul.f32 %v800, %v926
    %v936 = vmul.f32 %v801, %v926
    %v937 = vmul.f32 %v802, %v926
    %v938 = vmul.f32 %v803, %v926
    %v939 = vmul.f32 %v804, %v926
    %v940 = vmul.f32 %v805, %v926
    %v941 = vmul.f32 %v806, %v926
    %v942 = vmul.f32 %v807, %v926
    %v943 = vmul.f32 %v808, %v926
    %v944 = vmul.f32 %v809, %v926
    %v945 = vmul.f32 %v810, %v926
    %v946 = vmul.f32 %v811, %v926
    %v947 = vmul.f32 %v812, %v926
    %v948 = vmul.f32 %v813, %v926
    %v949 = vmul.f32 %v814, %v926
    %v950 = vmul.f32 %v815, %v926
    %v951 = vmul.f32 %v816, %v926
    %v952 = vmul.f32 %v817, %v926
    %v953 = vmul.f32 %v818, %v926
    %v954 = vmul.f32 %v819, %v926
    %v955 = vmul.f32 %v820, %v926
    %v956 = vmul.f32 %v821, %v926
    %v957 = vmul.f32 %v822, %v926
    %v958 = vmul.f32 %v823, %v926
    %v959 = vmul.f32 %v824, %v926
    %v960 = vmul.f32 %v825, %v926
    %v961 = vmul.f32 %v826, %v926
    %v962 = vmul.f32 %v827, %v926
    %v963 = vmul.f32 %v828, %v926
    %v964 = vmul.f32 %v829, %v926
    %v965 = vmul.f32 %v830, %v926
    %v966 = vmul.f32 %v831, %v926
    %v967 = vmul.f32 %v832, %v926
    %v968 = vmul.f32 %v833, %v926
    %v969 = vmul.f32 %v834, %v926
    %v970 = vmul.f32 %v835, %v926
    %v971 = vmul.f32 %v836, %v926
    %v972 = vmul.f32 %v837, %v926
    %v973 = vmul.f32 %v838, %v926
    %v974 = vmul.f32 %v839, %v926
    %v975 = vmul.f32 %v840, %v926
    %v976 = vmul.f32 %v841, %v926
    %v977 = vmul.f32 %v842, %v926
    %v978 = vmul.f32 %v843, %v926
    %v979 = vmul.f32 %v844, %v926
    %v980 = vmul.f32 %v845, %v926
    %v981 = vmul.f32 %v846, %v926
    %v982 = vmul.f32 %v847, %v926
    %v983 = vmul.f32 %v848, %v926
    %v984 = vmul.f32 %v849, %v926
    %v985 = vmul.f32 %v850, %v926
    %v986 = vmul.f32 %v851, %v926
    %v987 = vmul.f32 %v852, %v926
    %v988 = vmul.f32 %v853, %v926
    %v989 = vmul.f32 %v854, %v926
    %v990 = vmul.f32 %v855, %v926
    %v991 = vmul.f32 %v856, %v926
    %v992 = vmul.f32 %v857, %v926
    %v993 = vmul.f32 %v858, %v926
    %v994 = vmul.f32 %v859, %v926
    %v995 = vmul.f32 %v860, %v926
    %v996 = vmul.f32 %v861, %v926
    %v997 = vmul.f32 %v862, %v926
    %v998 = vmul.f32 %v863, %v926
    %v999 = vmul.f32 %v864, %v926
    %v1000 = vmul.f32 %v865, %v926
    %v1001 = vmul.f32 %v866, %v926
    %v1002 = vmul.f32 %v867, %v926
    %v1003 = vmul.f32 %v868, %v926
    %v1004 = vmul.f32 %v869, %v926
    %v1005 = vmul.f32 %v870, %v926
    %v1006 = vmul.f32 %v871, %v926
    %v1007 = vmul.f32 %v872, %v926
    %v1008 = vmul.f32 %v873, %v926
    %v1009 = vmul.f32 %v874, %v926
    %v1010 = vmul.f32 %v875, %v926
    %v1011 = vmul.f32 %v876, %v926
    %v1012 = vmul.f32 %v877, %v926
    %v1013 = vmul.f32 %v878, %v926
    %v1014 = vmul.f32 %v879, %v926
    %v1015 = vmul.f32 %v880, %v926
    %v1016 = vmul.f32 %v881, %v926
    %v1017 = vmul.f32 %v882, %v926
    %v1018 = vmul.f32 %v883, %v926
    %v1019 = vmul.f32 %v884, %v926
    %v1020 = vmul.f32 %v885, %v926
    %v1021 = vmul.f32 %v886, %v926
    %v1022 = vmul.f32 %v887, %v926
    %v1023 = vmul.f32 %v888, %v926
    %v1024 = vmul.f32 %v889, %v926
    %v1025 = vmul.f32 %v890, %v926
    %v1026 = vmul.f32 %v891, %v926
    %v1027 = vmul.f32 %v892, %v926
    %v1028 = vmul.f32 %v893, %v926
    %v1029 = vmul.f32 %v894, %v926
    %v1030 = vmul.f32 %v895, %v926
    %v1031 = vmul.f32 %v896, %v926
    %v1032 = vmul.f32 %v897, %v926
    %v1033 = vmul.f32 %v898, %v926
    %v1034 = vmul.f32 %v899, %v926
    %v1035 = vmul.f32 %v900, %v926
    %v1036 = vmul.f32 %v901, %v926
    %v1037 = vmul.f32 %v902, %v926
    %v1038 = vmul.f32 %v903, %v926
    %v1039 = vmul.f32 %v904, %v926
    %v1040 = vmul.f32 %v905, %v926
    %v1041 = vmul.f32 %v906, %v926
    %v1042 = vmul.f32 %v907, %v926
    %v1043 = vmul.f32 %v908, %v926
    %v1044 = vmul.f32 %v909, %v926
    %v1045 = vmul.f32 %v910, %v926
    %v1046 = vmul.f32 %v911, %v926
    %v1047 = vmul.f32 %v912, %v926
    %v1048 = vmul.f32 %v913, %v926
    %v1049 = vmul.f32 %v914, %v926
    %v1050 = vmul.f32 %v915, %v926
    %v1051 = vmul.f32 %v916, %v926
    %v1052 = vmul.f32 %v917, %v926
    %v1053 = vmul.f32 %v918, %v926
    %v1054 = vmul.f32 %v919, %v926
    %v1055 = vmul.f32 %v920, %v926
    %v1056 = vmul.f32 %v928, %v928
    %v1057 = vmul.f32 %v929, %v929
    %v1058 = vmul.f32 %v930, %v930
    %v1059 = vmul.f32 %v931, %v931
    %v1060 = vmul.f32 %v932, %v932
    %v1061 = vmul.f32 %v933, %v933
    %v1062 = vmul.f32 %v934, %v934
    %v1063 = vmul.f32 %v935, %v935
    %v1064 = vmul.f32 %v936, %v936
    %v1065 = vmul.f32 %v937, %v937
    %v1066 = vmul.f32 %v938, %v938
    %v1067 = vmul.f32 %v939, %v939
    %v1068 = vmul.f32 %v940, %v940
    %v1069 = vmul.f32 %v941, %v941
    %v1070 = vmul.f32 %v942, %v942
    %v1071 = vmul.f32 %v943, %v943
    %v1072 = vmul.f32 %v944, %v944
    %v1073 = vmul.f32 %v945, %v945
    %v1074 = vmul.f32 %v946, %v946
    %v1075 = vmul.f32 %v947, %v947
    %v1076 = vmul.f32 %v948, %v948
    %v1077 = vmul.f32 %v949, %v949
    %v1078 = vmul.f32 %v950, %v950
    %v1079 = vmul.f32 %v951, %v951
    %v1080 = vmul.f32 %v952, %v952
    %v1081 = vmul.f32 %v953, %v953
    %v1082 = vmul.f32 %v954, %v954
    %v1083 = vmul.f32 %v955, %v955
    %v1084 = vmul.f32 %v956, %v956
    %v1085 = vmul.f32 %v957, %v957
    %v1086 = vmul.f32 %v958, %v958
    %v1087 = vmul.f32 %v959, %v959
    %v1088 = vmul.f32 %v960, %v960
    %v1089 = vmul.f32 %v961, %v961
    %v1090 = vmul.f32 %v962, %v962
    %v1091 = vmul.f32 %v963, %v963
    %v1092 = vmul.f32 %v964, %v964
    %v1093 = vmul.f32 %v965, %v965
    %v1094 = vmul.f32 %v966, %v966
    %v1095 = vmul.f32 %v967, %v967
    %v1096 = vmul.f32 %v968, %v968
    %v1097 = vmul.f32 %v969, %v969
    %v1098 = vmul.f32 %v970, %v970
    %v1099 = vmul.f32 %v971, %v971
    %v1100 = vmul.f32 %v972, %v972
    %v1101 = vmul.f32 %v973, %v973
    %v1102 = vmul.f32 %v974, %v974
    %v1103 = vmul.f32 %v975, %v975
    %v1104 = vmul.f32 %v976, %v976
    %v1105 = vmul.f32 %v977, %v977
    %v1106 = vmul.f32 %v978, %v978
    %v1107 = vmul.f32 %v979, %v979
    %v1108 = vmul.f32 %v980, %v980
    %v1109 = vmul.f32 %v981, %v981
    %v1110 = vmul.f32 %v982, %v982
    %v1111 = vmul.f32 %v983, %v983
    %v1112 = vmul.f32 %v984, %v984
    %v1113 = vmul.f32 %v985, %v985
    %v1114 = vmul.f32 %v986, %v986
    %v1115 = vmul.f32 %v987, %v987
    %v1116 = vmul.f32 %v988, %v988
    %v1117 = vmul.f32 %v989, %v989
    %v1118 = vmul.f32 %v990, %v990
    %v1119 = vmul.f32 %v991, %v991
    %v1120 = vmul.f32 %v992, %v992
    %v1121 = vmul.f32 %v993, %v993
    %v1122 = vmul.f32 %v994, %v994
    %v1123 = vmul.f32 %v995, %v995
    %v1124 = vmul.f32 %v996, %v996
    %v1125 = vmul.f32 %v997, %v997
    %v1126 = vmul.f32 %v998, %v998
    %v1127 = vmul.f32 %v999, %v999
    %v1128 = vmul.f32 %v1000, %v1000
    %v1129 = vmul.f32 %v1001, %v1001
    %v1130 = vmul.f32 %v1002, %v1002
    %v1131 = vmul.f32 %v1003, %v1003
    %v1132 = vmul.f32 %v1004, %v1004
    %v1133 = vmul.f32 %v1005, %v1005
    %v1134 = vmul.f32 %v1006, %v1006
    %v1135 = vmul.f32 %v1007, %v1007
    %v1136 = vmul.f32 %v1008, %v1008
    %v1137 = vmul.f32 %v1009, %v1009
    %v1138 = vmul.f32 %v1010, %v1010
    %v1139 = vmul.f32 %v1011, %v1011
    %v1140 = vmul.f32 %v1012, %v1012
    %v1141 = vmul.f32 %v1013, %v1013
    %v1142 = vmul.f32 %v1014, %v1014
    %v1143 = vmul.f32 %v1015, %v1015
    %v1144 = vmul.f32 %v1016, %v1016
    %v1145 = vmul.f32 %v1017, %v1017
    %v1146 = vmul.f32 %v1018, %v1018
    %v1147 = vmul.f32 %v1019, %v1019
    %v1148 = vmul.f32 %v1020, %v1020
    %v1149 = vmul.f32 %v1021, %v1021
    %v1150 = vmul.f32 %v1022, %v1022
    %v1151 = vmul.f32 %v1023, %v1023
    %v1152 = vmul.f32 %v1024, %v1024
    %v1153 = vmul.f32 %v1025, %v1025
    %v1154 = vmul.f32 %v1026, %v1026
    %v1155 = vmul.f32 %v1027, %v1027
    %v1156 = vmul.f32 %v1028, %v1028
    %v1157 = vmul.f32 %v1029, %v1029
    %v1158 = vmul.f32 %v1030, %v1030
    %v1159 = vmul.f32 %v1031, %v1031
    %v1160 = vmul.f32 %v1032, %v1032
    %v1161 = vmul.f32 %v1033, %v1033
    %v1162 = vmul.f32 %v1034, %v1034
    %v1163 = vmul.f32 %v1035, %v1035
    %v1164 = vmul.f32 %v1036, %v1036
    %v1165 = vmul.f32 %v1037, %v1037
    %v1166 = vmul.f32 %v1038, %v1038
    %v1167 = vmul.f32 %v1039, %v1039
    %v1168 = vmul.f32 %v1040, %v1040
    %v1169 = vmul.f32 %v1041, %v1041
    %v1170 = vmul.f32 %v1042, %v1042
    %v1171 = vmul.f32 %v1043, %v1043
    %v1172 = vmul.f32 %v1044, %v1044
    %v1173 = vmul.f32 %v1045, %v1045
    %v1174 = vmul.f32 %v1046, %v1046
    %v1175 = vmul.f32 %v1047, %v1047
    %v1176 = vmul.f32 %v1048, %v1048
    %v1177 = vmul.f32 %v1049, %v1049
    %v1178 = vmul.f32 %v1050, %v1050
    %v1179 = vmul.f32 %v1051, %v1051
    %v1180 = vmul.f32 %v1052, %v1052
    %v1181 = vmul.f32 %v1053, %v1053
    %v1182 = vmul.f32 %v1054, %v1054
    %v1183 = vmul.f32 %v1055, %v1055
    %v1184 = vsub.f32 0.0, %v1056
    %v1185 = vsub.f32 0.0, %v1057
    %v1186 = vsub.f32 0.0, %v1058
    %v1187 = vsub.f32 0.0, %v1059
    %v1188 = vsub.f32 0.0, %v1060
    %v1189 = vsub.f32 0.0, %v1061
    %v1190 = vsub.f32 0.0, %v1062
    %v1191 = vsub.f32 0.0, %v1063
    %v1192 = vsub.f32 0.0, %v1064
    %v1193 = vsub.f32 0.0, %v1065
    %v1194 = vsub.f32 0.0, %v1066
    %v1195 = vsub.f32 0.0, %v1067
    %v1196 = vsub.f32 0.0, %v1068
    %v1197 = vsub.f32 0.0, %v1069
    %v1198 = vsub.f32 0.0, %v1070
    %v1199 = vsub.f32 0.0, %v1071
    %v1200 = vsub.f32 0.0, %v1072
    %v1201 = vsub.f32 0.0, %v1073
    %v1202 = vsub.f32 0.0, %v1074
    %v1203 = vsub.f32 0.0, %v1075
    %v1204 = vsub.f32 0.0, %v1076
    %v1205 = vsub.f32 0.0, %v1077
    %v1206 = vsub.f32 0.0, %v1078
    %v1207 = vsub.f32 0.0, %v1079
    %v1208 = vsub.f32 0.0, %v1080
    %v1209 = vsub.f32 0.0, %v1081
    %v1210 = vsub.f32 0.0, %v1082
    %v1211 = vsub.f32 0.0, %v1083
    %v1212 = vsub.f32 0.0, %v1084
    %v1213 = vsub.f32 0.0, %v1085
    %v1214 = vsub.f32 0.0, %v1086
    %v1215 = vsub.f32 0.0, %v1087
    %v1216 = vsub.f32 0.0, %v1088
    %v1217 = vsub.f32 0.0, %v1089
    %v1218 = vsub.f32 0.0, %v1090
    %v1219 = vsub.f32 0.0, %v1091
    %v1220 = vsub.f32 0.0, %v1092
    %v1221 = vsub.f32 0.0, %v1093
    %v1222 = vsub.f32 0.0, %v1094
    %v1223 = vsub.f32 0.0, %v1095
    %v1224 = vsub.f32 0.0, %v1096
    %v1225 = vsub.f32 0.0, %v1097
    %v1226 = vsub.f32 0.0, %v1098
    %v1227 = vsub.f32 0.0, %v1099
    %v1228 = vsub.f32 0.0, %v1100
    %v1229 = vsub.f32 0.0, %v1101
    %v1230 = vsub.f32 0.0, %v1102
    %v1231 = vsub.f32 0.0, %v1103
    %v1232 = vsub.f32 0.0, %v1104
    %v1233 = vsub.f32 0.0, %v1105
    %v1234 = vsub.f32 0.0, %v1106
    %v1235 = vsub.f32 0.0, %v1107
    %v1236 = vsub.f32 0.0, %v1108
    %v1237 = vsub.f32 0.0, %v1109
    %v1238 = vsub.f32 0.0, %v1110
    %v1239 = vsub.f32 0.0, %v1111
    %v1240 = vsub.f32 0.0, %v1112
    %v1241 = vsub.f32 0.0, %v1113
    %v1242 = vsub.f32 0.0, %v1114
    %v1243 = vsub.f32 0.0, %v1115
    %v1244 = vsub.f32 0.0, %v1116
    %v1245 = vsub.f32 0.0, %v1117
    %v1246 = vsub.f32 0.0, %v1118
    %v1247 = vsub.f32 0.0, %v1119
    %v1248 = vsub.f32 0.0, %v1120
    %v1249 = vsub.f32 0.0, %v1121
    %v1250 = vsub.f32 0.0, %v1122
    %v1251 = vsub.f32 0.0, %v1123
    %v1252 = vsub.f32 0.0, %v1124
    %v1253 = vsub.f32 0.0, %v1125
    %v1254 = vsub.f32 0.0, %v1126
    %v1255 = vsub.f32 0.0, %v1127
    %v1256 = vsub.f32 0.0, %v1128
    %v1257 = vsub.f32 0.0, %v1129
    %v1258 = vsub.f32 0.0, %v1130
    %v1259 = vsub.f32 0.0, %v1131
    %v1260 = vsub.f32 0.0, %v1132
    %v1261 = vsub.f32 0.0, %v1133
    %v1262 = vsub.f32 0.0, %v1134
    %v1263 = vsub.f32 0.0, %v1135
    %v1264 = vsub.f32 0.0, %v1136
    %v1265 = vsub.f32 0.0, %v1137
    %v1266 = vsub.f32 0.0, %v1138
    %v1267 = vsub.f32 0.0, %v1139
    %v1268 = vsub.f32 0.0, %v1140
    %v1269 = vsub.f32 0.0, %v1141
    %v1270 = vsub.f32 0.0, %v1142
    %v1271 = vsub.f32 0.0, %v1143
    %v1272 = vsub.f32 0.0, %v1144
    %v1273 = vsub.f32 0.0, %v1145
    %v1274 = vsub.f32 0.0, %v1146
    %v1275 = vsub.f32 0.0, %v1147
    %v1276 = vsub.f32 0.0, %v1148
    %v1277 = vsub.f32 0.0, %v1149
    %v1278 = vsub.f32 0.0, %v1150
    %v1279 = vsub.f32 0.0, %v1151
    %v1280 = vsub.f32 0.0, %v1152
    %v1281 = vsub.f32 0.0, %v1153
    %v1282 = vsub.f32 0.0, %v1154
    %v1283 = vsub.f32 0.0, %v1155
    %v1284 = vsub.f32 0.0, %v1156
    %v1285 = vsub.f32 0.0, %v1157
    %v1286 = vsub.f32 0.0, %v1158
    %v1287 = vsub.f32 0.0, %v1159
    %v1288 = vsub.f32 0.0, %v1160
    %v1289 = vsub.f32 0.0, %v1161
    %v1290 = vsub.f32 0.0, %v1162
    %v1291 = vsub.f32 0.0, %v1163
    %v1292 = vsub.f32 0.0, %v1164
    %v1293 = vsub.f32 0.0, %v1165
    %v1294 = vsub.f32 0.0, %v1166
    %v1295 = vsub.f32 0.0, %v1167
    %v1296 = vsub.f32 0.0, %v1168
    %v1297 = vsub.f32 0.0, %v1169
    %v1298 = vsub.f32 0.0, %v1170
    %v1299 = vsub.f32 0.0, %v1171
    %v1300 = vsub.f32 0.0, %v1172
    %v1301 = vsub.f32 0.0, %v1173
    %v1302 = vsub.f32 0.0, %v1174
    %v1303 = vsub.f32 0.0, %v1175
    %v1304 = vsub.f32 0.0, %v1176
    %v1305 = vsub.f32 0.0, %v1177
    %v1306 = vsub.f32 0.0, %v1178
    %v1307 = vsub.f32 0.0, %v1179
    %v1308 = vsub.f32 0.0, %v1180
    %v1309 = vsub.f32 0.0, %v1181
    %v1310 = vsub.f32 0.0, %v1182
    %v1311 = vsub.f32 0.0, %v1183
    %v1312 = vmul.f32 %v1184, 1.442695
    %v1313 = vpow.pop %v1312
    %v1314 = vmul.f32 %v1185, 1.442695
    %v1315 = vpow.pop %v1314
    %v1316 = vmul.f32 %v1186, 1.442695
    %v1317 = vpow.pop %v1316
    %v1318 = vmul.f32 %v1187, 1.442695
    %v1319 = vpow.pop %v1318
    %v1320 = vmul.f32 %v1188, 1.442695
    %v1321 = vpow.pop %v1320
    %v1322 = vmul.f32 %v1189, 1.442695
    %v1323 = vpow.pop %v1322
    %v1324 = vmul.f32 %v1190, 1.442695
    %v1325 = vpow.pop %v1324
    %v1326 = vmul.f32 %v1191, 1.442695
    %v1327 = vpow.pop %v1326
    %v1328 = vmul.f32 %v1192, 1.442695
    %v1329 = vpow.pop %v1328
    %v1330 = vmul.f32 %v1193, 1.442695
    %v1331 = vpow.pop %v1330
    %v1332 = vmul.f32 %v1194, 1.442695
    %v1333 = vpow.pop %v1332
    %v1334 = vmul.f32 %v1195, 1.442695
    %v1335 = vpow.pop %v1334
    %v1336 = vmul.f32 %v1196, 1.442695
    %v1337 = vpow.pop %v1336
    %v1338 = vmul.f32 %v1197, 1.442695
    %v1339 = vpow.pop %v1338
    %v1340 = vmul.f32 %v1198, 1.442695
    %v1341 = vpow.pop %v1340
    %v1342 = vmul.f32 %v1199, 1.442695
    %v1343 = vpow.pop %v1342
    %v1344 = vmul.f32 %v1200, 1.442695
    %v1345 = vpow.pop %v1344
    %v1346 = vmul.f32 %v1201, 1.442695
    %v1347 = vpow.pop %v1346
    %v1348 = vmul.f32 %v1202, 1.442695
    %v1349 = vpow.pop %v1348
    %v1350 = vmul.f32 %v1203, 1.442695
    %v1351 = vpow.pop %v1350
    %v1352 = vmul.f32 %v1204, 1.442695
    %v1353 = vpow.pop %v1352
    %v1354 = vmul.f32 %v1205, 1.442695
    %v1355 = vpow.pop %v1354
    %v1356 = vmul.f32 %v1206, 1.442695
    %v1357 = vpow.pop %v1356
    %v1358 = vmul.f32 %v1207, 1.442695
    %v1359 = vpow.pop %v1358
    %v1360 = vmul.f32 %v1208, 1.442695
    %v1361 = vpow.pop %v1360
    %v1362 = vmul.f32 %v1209, 1.442695
    %v1363 = vpow.pop %v1362
    %v1364 = vmul.f32 %v1210, 1.442695
    %v1365 = vpow.pop %v1364
    %v1366 = vmul.f32 %v1211, 1.442695
    %v1367 = vpow.pop %v1366
    %v1368 = vmul.f32 %v1212, 1.442695
    %v1369 = vpow.pop %v1368
    %v1370 = vmul.f32 %v1213, 1.442695
    %v1371 = vpow.pop %v1370
    %v1372 = vmul.f32 %v1214, 1.442695
    %v1373 = vpow.pop %v1372
    %v1374 = vmul.f32 %v1215, 1.442695
    %v1375 = vpow.pop %v1374
    %v1376 = vmul.f32 %v1216, 1.442695
    %v1377 = vpow.pop %v1376
    %v1378 = vmul.f32 %v1217, 1.442695
    %v1379 = vpow.pop %v1378
    %v1380 = vmul.f32 %v1218, 1.442695
    %v1381 = vpow.pop %v1380
    %v1382 = vmul.f32 %v1219, 1.442695
    %v1383 = vpow.pop %v1382
    %v1384 = vmul.f32 %v1220, 1.442695
    %v1385 = vpow.pop %v1384
    %v1386 = vmul.f32 %v1221, 1.442695
    %v1387 = vpow.pop %v1386
    %v1388 = vmul.f32 %v1222, 1.442695
    %v1389 = vpow.pop %v1388
    %v1390 = vmul.f32 %v1223, 1.442695
    %v1391 = vpow.pop %v1390
    %v1392 = vmul.f32 %v1224, 1.442695
    %v1393 = vpow.pop %v1392
    %v1394 = vmul.f32 %v1225, 1.442695
    %v1395 = vpow.pop %v1394
    %v1396 = vmul.f32 %v1226, 1.442695
    %v1397 = vpow.pop %v1396
    %v1398 = vmul.f32 %v1227, 1.442695
    %v1399 = vpow.pop %v1398
    %v1400 = vmul.f32 %v1228, 1.442695
    %v1401 = vpow.pop %v1400
    %v1402 = vmul.f32 %v1229, 1.442695
    %v1403 = vpow.pop %v1402
    %v1404 = vmul.f32 %v1230, 1.442695
    %v1405 = vpow.pop %v1404
    %v1406 = vmul.f32 %v1231, 1.442695
    %v1407 = vpow.pop %v1406
    %v1408 = vmul.f32 %v1232, 1.442695
    %v1409 = vpow.pop %v1408
    %v1410 = vmul.f32 %v1233, 1.442695
    %v1411 = vpow.pop %v1410
    %v1412 = vmul.f32 %v1234, 1.442695
    %v1413 = vpow.pop %v1412
    %v1414 = vmul.f32 %v1235, 1.442695
    %v1415 = vpow.pop %v1414
    %v1416 = vmul.f32 %v1236, 1.442695
    %v1417 = vpow.pop %v1416
    %v1418 = vmul.f32 %v1237, 1.442695
    %v1419 = vpow.pop %v1418
    %v1420 = vmul.f32 %v1238, 1.442695
    %v1421 = vpow.pop %v1420
    %v1422 = vmul.f32 %v1239, 1.442695
    %v1423 = vpow.pop %v1422
    %v1424 = vmul.f32 %v1240, 1.442695
    %v1425 = vpow.pop %v1424
    %v1426 = vmul.f32 %v1241, 1.442695
    %v1427 = vpow.pop %v1426
    %v1428 = vmul.f32 %v1242, 1.442695
    %v1429 = vpow.pop %v1428
    %v1430 = vmul.f32 %v1243, 1.442695
    %v1431 = vpow.pop %v1430
    %v1432 = vmul.f32 %v1244, 1.442695
    %v1433 = vpow.pop %v1432
    %v1434 = vmul.f32 %v1245, 1.442695
    %v1435 = vpow.pop %v1434
    %v1436 = vmul.f32 %v1246, 1.442695
    %v1437 = vpow.pop %v1436
    %v1438 = vmul.f32 %v1247, 1.442695
    %v1439 = vpow.pop %v1438
    %v1440 = vmul.f32 %v1248, 1.442695
    %v1441 = vpow.pop %v1440
    %v1442 = vmul.f32 %v1249, 1.442695
    %v1443 = vpow.pop %v1442
    %v1444 = vmul.f32 %v1250, 1.442695
    %v1445 = vpow.pop %v1444
    %v1446 = vmul.f32 %v1251, 1.442695
    %v1447 = vpow.pop %v1446
    %v1448 = vmul.f32 %v1252, 1.442695
    %v1449 = vpow.pop %v1448
    %v1450 = vmul.f32 %v1253, 1.442695
    %v1451 = vpow.pop %v1450
    %v1452 = vmul.f32 %v1254, 1.442695
    %v1453 = vpow.pop %v1452
    %v1454 = vmul.f32 %v1255, 1.442695
    %v1455 = vpow.pop %v1454
    %v1456 = vmul.f32 %v1256, 1.442695
    %v1457 = vpow.pop %v1456
    %v1458 = vmul.f32 %v1257, 1.442695
    %v1459 = vpow.pop %v1458
    %v1460 = vmul.f32 %v1258, 1.442695
    %v1461 = vpow.pop %v1460
    %v1462 = vmul.f32 %v1259, 1.442695
    %v1463 = vpow.pop %v1462
    %v1464 = vmul.f32 %v1260, 1.442695
    %v1465 = vpow.pop %v1464
    %v1466 = vmul.f32 %v1261, 1.442695
    %v1467 = vpow.pop %v1466
    %v1468 = vmul.f32 %v1262, 1.442695
    %v1469 = vpow.pop %v1468
    %v1470 = vmul.f32 %v1263, 1.442695
    %v1471 = vpow.pop %v1470
    %v1472 = vmul.f32 %v1264, 1.442695
    %v1473 = vpow.pop %v1472
    %v1474 = vmul.f32 %v1265, 1.442695
    %v1475 = vpow.pop %v1474
    %v1476 = vmul.f32 %v1266, 1.442695
    %v1477 = vpow.pop %v1476
    %v1478 = vmul.f32 %v1267, 1.442695
    %v1479 = vpow.pop %v1478
    %v1480 = vmul.f32 %v1268, 1.442695
    %v1481 = vpow.pop %v1480
    %v1482 = vmul.f32 %v1269, 1.442695
    %v1483 = vpow.pop %v1482
    %v1484 = vmul.f32 %v1270, 1.442695
    %v1485 = vpow.pop %v1484
    %v1486 = vmul.f32 %v1271, 1.442695
    %v1487 = vpow.pop %v1486
    %v1488 = vmul.f32 %v1272, 1.442695
    %v1489 = vpow.pop %v1488
    %v1490 = vmul.f32 %v1273, 1.442695
    %v1491 = vpow.pop %v1490
    %v1492 = vmul.f32 %v1274, 1.442695
    %v1493 = vpow.pop %v1492
    %v1494 = vmul.f32 %v1275, 1.442695
    %v1495 = vpow.pop %v1494
    %v1496 = vmul.f32 %v1276, 1.442695
    %v1497 = vpow.pop %v1496
    %v1498 = vmul.f32 %v1277, 1.442695
    %v1499 = vpow.pop %v1498
    %v1500 = vmul.f32 %v1278, 1.442695
    %v1501 = vpow.pop %v1500
    %v1502 = vmul.f32 %v1279, 1.442695
    %v1503 = vpow.pop %v1502
    %v1504 = vmul.f32 %v1280, 1.442695
    %v1505 = vpow.pop %v1504
    %v1506 = vmul.f32 %v1281, 1.442695
    %v1507 = vpow.pop %v1506
    %v1508 = vmul.f32 %v1282, 1.442695
    %v1509 = vpow.pop %v1508
    %v1510 = vmul.f32 %v1283, 1.442695
    %v1511 = vpow.pop %v1510
    %v1512 = vmul.f32 %v1284, 1.442695
    %v1513 = vpow.pop %v1512
    %v1514 = vmul.f32 %v1285, 1.442695
    %v1515 = vpow.pop %v1514
    %v1516 = vmul.f32 %v1286, 1.442695
    %v1517 = vpow.pop %v1516
    %v1518 = vmul.f32 %v1287, 1.442695
    %v1519 = vpow.pop %v1518
    %v1520 = vmul.f32 %v1288, 1.442695
    %v1521 = vpow.pop %v1520
    %v1522 = vmul.f32 %v1289, 1.442695
    %v1523 = vpow.pop %v1522
    %v1524 = vmul.f32 %v1290, 1.442695
    %v1525 = vpow.pop %v1524
    %v1526 = vmul.f32 %v1291, 1.442695
    %v1527 = vpow.pop %v1526
    %v1528 = vmul.f32 %v1292, 1.442695
    %v1529 = vpow.pop %v1528
    %v1530 = vmul.f32 %v1293, 1.442695
    %v1531 = vpow.pop %v1530
    %v1532 = vmul.f32 %v1294, 1.442695
    %v1533 = vpow.pop %v1532
    %v1534 = vmul.f32 %v1295, 1.442695
    %v1535 = vpow.pop %v1534
    %v1536 = vmul.f32 %v1296, 1.442695
    %v1537 = vpow.pop %v1536
    %v1538 = vmul.f32 %v1297, 1.442695
    %v1539 = vpow.pop %v1538
    %v1540 = vmul.f32 %v1298, 1.442695
    %v1541 = vpow.pop %v1540
    %v1542 = vmul.f32 %v1299, 1.442695
    %v1543 = vpow.pop %v1542
    %v1544 = vmul.f32 %v1300, 1.442695
    %v1545 = vpow.pop %v1544
    %v1546 = vmul.f32 %v1301, 1.442695
    %v1547 = vpow.pop %v1546
    %v1548 = vmul.f32 %v1302, 1.442695
    %v1549 = vpow.pop %v1548
    %v1550 = vmul.f32 %v1303, 1.442695
    %v1551 = vpow.pop %v1550
    %v1552 = vmul.f32 %v1304, 1.442695
    %v1553 = vpow.pop %v1552
    %v1554 = vmul.f32 %v1305, 1.442695
    %v1555 = vpow.pop %v1554
    %v1556 = vmul.f32 %v1306, 1.442695
    %v1557 = vpow.pop %v1556
    %v1558 = vmul.f32 %v1307, 1.442695
    %v1559 = vpow.pop %v1558
    %v1560 = vmul.f32 %v1308, 1.442695
    %v1561 = vpow.pop %v1560
    %v1562 = vmul.f32 %v1309, 1.442695
    %v1563 = vpow.pop %v1562
    %v1564 = vmul.f32 %v1310, 1.442695
    %v1565 = vpow.pop %v1564
    %v1566 = vmul.f32 %v1311, 1.442695
    %v1567 = vpow.pop %v1566
    %v1568 = vld [vmem:[%s3] sm:$0x1]
    %v1570 = vlaneseq
    %v1571 = vshrl.u32 %v1570, 7
    %v1572 = vsub.s32 0, %v1571
    %v1573 = vrot.slane %v1568, %v1572
    %v1575 = vmul.f32 %v1313, %v1573
    %v1576 = vmul.f32 %v1315, %v1573
    %v1577 = vmul.f32 %v1317, %v1573
    %v1578 = vmul.f32 %v1319, %v1573
    %v1579 = vmul.f32 %v1321, %v1573
    %v1580 = vmul.f32 %v1323, %v1573
    %v1581 = vmul.f32 %v1325, %v1573
    %v1582 = vmul.f32 %v1327, %v1573
    %v1583 = vmul.f32 %v1329, %v1573
    %v1584 = vmul.f32 %v1331, %v1573
    %v1585 = vmul.f32 %v1333, %v1573
    %v1586 = vmul.f32 %v1335, %v1573
    %v1587 = vmul.f32 %v1337, %v1573
    %v1588 = vmul.f32 %v1339, %v1573
    %v1589 = vmul.f32 %v1341, %v1573
    %v1590 = vmul.f32 %v1343, %v1573
    %v1591 = vmul.f32 %v1345, %v1573
    %v1592 = vmul.f32 %v1347, %v1573
    %v1593 = vmul.f32 %v1349, %v1573
    %v1594 = vmul.f32 %v1351, %v1573
    %v1595 = vmul.f32 %v1353, %v1573
    %v1596 = vmul.f32 %v1355, %v1573
    %v1597 = vmul.f32 %v1357, %v1573
    %v1598 = vmul.f32 %v1359, %v1573
    %v1599 = vmul.f32 %v1361, %v1573
    %v1600 = vmul.f32 %v1363, %v1573
    %v1601 = vmul.f32 %v1365, %v1573
    %v1602 = vmul.f32 %v1367, %v1573
    %v1603 = vmul.f32 %v1369, %v1573
    %v1604 = vmul.f32 %v1371, %v1573
    %v1605 = vmul.f32 %v1373, %v1573
    %v1606 = vmul.f32 %v1375, %v1573
    %v1607 = vmul.f32 %v1377, %v1573
    %v1608 = vmul.f32 %v1379, %v1573
    %v1609 = vmul.f32 %v1381, %v1573
    %v1610 = vmul.f32 %v1383, %v1573
    %v1611 = vmul.f32 %v1385, %v1573
    %v1612 = vmul.f32 %v1387, %v1573
    %v1613 = vmul.f32 %v1389, %v1573
    %v1614 = vmul.f32 %v1391, %v1573
    %v1615 = vmul.f32 %v1393, %v1573
    %v1616 = vmul.f32 %v1395, %v1573
    %v1617 = vmul.f32 %v1397, %v1573
    %v1618 = vmul.f32 %v1399, %v1573
    %v1619 = vmul.f32 %v1401, %v1573
    %v1620 = vmul.f32 %v1403, %v1573
    %v1621 = vmul.f32 %v1405, %v1573
    %v1622 = vmul.f32 %v1407, %v1573
    %v1623 = vmul.f32 %v1409, %v1573
    %v1624 = vmul.f32 %v1411, %v1573
    %v1625 = vmul.f32 %v1413, %v1573
    %v1626 = vmul.f32 %v1415, %v1573
    %v1627 = vmul.f32 %v1417, %v1573
    %v1628 = vmul.f32 %v1419, %v1573
    %v1629 = vmul.f32 %v1421, %v1573
    %v1630 = vmul.f32 %v1423, %v1573
    %v1631 = vmul.f32 %v1425, %v1573
    %v1632 = vmul.f32 %v1427, %v1573
    %v1633 = vmul.f32 %v1429, %v1573
    %v1634 = vmul.f32 %v1431, %v1573
    %v1635 = vmul.f32 %v1433, %v1573
    %v1636 = vmul.f32 %v1435, %v1573
    %v1637 = vmul.f32 %v1437, %v1573
    %v1638 = vmul.f32 %v1439, %v1573
    %v1639 = vmul.f32 %v1441, %v1573
    %v1640 = vmul.f32 %v1443, %v1573
    %v1641 = vmul.f32 %v1445, %v1573
    %v1642 = vmul.f32 %v1447, %v1573
    %v1643 = vmul.f32 %v1449, %v1573
    %v1644 = vmul.f32 %v1451, %v1573
    %v1645 = vmul.f32 %v1453, %v1573
    %v1646 = vmul.f32 %v1455, %v1573
    %v1647 = vmul.f32 %v1457, %v1573
    %v1648 = vmul.f32 %v1459, %v1573
    %v1649 = vmul.f32 %v1461, %v1573
    %v1650 = vmul.f32 %v1463, %v1573
    %v1651 = vmul.f32 %v1465, %v1573
    %v1652 = vmul.f32 %v1467, %v1573
    %v1653 = vmul.f32 %v1469, %v1573
    %v1654 = vmul.f32 %v1471, %v1573
    %v1655 = vmul.f32 %v1473, %v1573
    %v1656 = vmul.f32 %v1475, %v1573
    %v1657 = vmul.f32 %v1477, %v1573
    %v1658 = vmul.f32 %v1479, %v1573
    %v1659 = vmul.f32 %v1481, %v1573
    %v1660 = vmul.f32 %v1483, %v1573
    %v1661 = vmul.f32 %v1485, %v1573
    %v1662 = vmul.f32 %v1487, %v1573
    %v1663 = vmul.f32 %v1489, %v1573
    %v1664 = vmul.f32 %v1491, %v1573
    %v1665 = vmul.f32 %v1493, %v1573
    %v1666 = vmul.f32 %v1495, %v1573
    %v1667 = vmul.f32 %v1497, %v1573
    %v1668 = vmul.f32 %v1499, %v1573
    %v1669 = vmul.f32 %v1501, %v1573
    %v1670 = vmul.f32 %v1503, %v1573
    %v1671 = vmul.f32 %v1505, %v1573
    %v1672 = vmul.f32 %v1507, %v1573
    %v1673 = vmul.f32 %v1509, %v1573
    %v1674 = vmul.f32 %v1511, %v1573
    %v1675 = vmul.f32 %v1513, %v1573
    %v1676 = vmul.f32 %v1515, %v1573
    %v1677 = vmul.f32 %v1517, %v1573
    %v1678 = vmul.f32 %v1519, %v1573
    %v1679 = vmul.f32 %v1521, %v1573
    %v1680 = vmul.f32 %v1523, %v1573
    %v1681 = vmul.f32 %v1525, %v1573
    %v1682 = vmul.f32 %v1527, %v1573
    %v1683 = vmul.f32 %v1529, %v1573
    %v1684 = vmul.f32 %v1531, %v1573
    %v1685 = vmul.f32 %v1533, %v1573
    %v1686 = vmul.f32 %v1535, %v1573
    %v1687 = vmul.f32 %v1537, %v1573
    %v1688 = vmul.f32 %v1539, %v1573
    %v1689 = vmul.f32 %v1541, %v1573
    %v1690 = vmul.f32 %v1543, %v1573
    %v1691 = vmul.f32 %v1545, %v1573
    %v1692 = vmul.f32 %v1547, %v1573
    %v1693 = vmul.f32 %v1549, %v1573
    %v1694 = vmul.f32 %v1551, %v1573
    %v1695 = vmul.f32 %v1553, %v1573
    %v1696 = vmul.f32 %v1555, %v1573
    %v1697 = vmul.f32 %v1557, %v1573
    %v1698 = vmul.f32 %v1559, %v1573
    %v1699 = vmul.f32 %v1561, %v1573
    %v1700 = vmul.f32 %v1563, %v1573
    %v1701 = vmul.f32 %v1565, %v1573
    %v1702 = vmul.f32 %v1567, %v1573
    %1703 = vst [vmem:[#allocation2] sm:$0xff] %v1575
    %1704 = vst [vmem:[#allocation2 + $0x8] sm:$0xff] %v1576
    %1705 = vst [vmem:[#allocation2 + $0x10] sm:$0xff] %v1577
    %1706 = vst [vmem:[#allocation2 + $0x18] sm:$0xff] %v1578
    %1707 = vst [vmem:[#allocation2 + $0x20] sm:$0xff] %v1579
    %1708 = vst [vmem:[#allocation2 + $0x28] sm:$0xff] %v1580
    %1709 = vst [vmem:[#allocation2 + $0x30] sm:$0xff] %v1581
    %1710 = vst [vmem:[#allocation2 + $0x38] sm:$0xff] %v1582
    %1711 = vst [vmem:[#allocation2 + $0x40] sm:$0xff] %v1583
    %1712 = vst [vmem:[#allocation2 + $0x48] sm:$0xff] %v1584
    %1713 = vst [vmem:[#allocation2 + $0x50] sm:$0xff] %v1585
    %1714 = vst [vmem:[#allocation2 + $0x58] sm:$0xff] %v1586
    %1715 = vst [vmem:[#allocation2 + $0x60] sm:$0xff] %v1587
    %1716 = vst [vmem:[#allocation2 + $0x68] sm:$0xff] %v1588
    %1717 = vst [vmem:[#allocation2 + $0x70] sm:$0xff] %v1589
    %1718 = vst [vmem:[#allocation2 + $0x78] sm:$0xff] %v1590
    %1719 = vst [vmem:[#allocation2 + $0x80] sm:$0xff] %v1591
    %1720 = vst [vmem:[#allocation2 + $0x88] sm:$0xff] %v1592
    %1721 = vst [vmem:[#allocation2 + $0x90] sm:$0xff] %v1593
    %1722 = vst [vmem:[#allocation2 + $0x98] sm:$0xff] %v1594
    %1723 = vst [vmem:[#allocation2 + $0xa0] sm:$0xff] %v1595
    %1724 = vst [vmem:[#allocation2 + $0xa8] sm:$0xff] %v1596
    %1725 = vst [vmem:[#allocation2 + $0xb0] sm:$0xff] %v1597
    %1726 = vst [vmem:[#allocation2 + $0xb8] sm:$0xff] %v1598
    %1727 = vst [vmem:[#allocation2 + $0xc0] sm:$0xff] %v1599
    %1728 = vst [vmem:[#allocation2 + $0xc8] sm:$0xff] %v1600
    %1729 = vst [vmem:[#allocation2 + $0xd0] sm:$0xff] %v1601
    %1730 = vst [vmem:[#allocation2 + $0xd8] sm:$0xff] %v1602
    %1731 = vst [vmem:[#allocation2 + $0xe0] sm:$0xff] %v1603
    %1732 = vst [vmem:[#allocation2 + $0xe8] sm:$0xff] %v1604
    %1733 = vst [vmem:[#allocation2 + $0xf0] sm:$0xff] %v1605
    %1734 = vst [vmem:[#allocation2 + $0xf8] sm:$0xff] %v1606
    %1735 = vst [vmem:[#allocation2 + $0x100] sm:$0xff] %v1607
    %1736 = vst [vmem:[#allocation2 + $0x108] sm:$0xff] %v1608
    %1737 = vst [vmem:[#allocation2 + $0x110] sm:$0xff] %v1609
    %1738 = vst [vmem:[#allocation2 + $0x118] sm:$0xff] %v1610
    %1739 = vst [vmem:[#allocation2 + $0x120] sm:$0xff] %v1611
    %1740 = vst [vmem:[#allocation2 + $0x128] sm:$0xff] %v1612
    %1741 = vst [vmem:[#allocation2 + $0x130] sm:$0xff] %v1613
    %1742 = vst [vmem:[#allocation2 + $0x138] sm:$0xff] %v1614
    %1743 = vst [vmem:[#allocation2 + $0x140] sm:$0xff] %v1615
    %1744 = vst [vmem:[#allocation2 + $0x148] sm:$0xff] %v1616
    %1745 = vst [vmem:[#allocation2 + $0x150] sm:$0xff] %v1617
    %1746 = vst [vmem:[#allocation2 + $0x158] sm:$0xff] %v1618
    %1747 = vst [vmem:[#allocation2 + $0x160] sm:$0xff] %v1619
    %1748 = vst [vmem:[#allocation2 + $0x168] sm:$0xff] %v1620
    %1749 = vst [vmem:[#allocation2 + $0x170] sm:$0xff] %v1621
    %1750 = vst [vmem:[#allocation2 + $0x178] sm:$0xff] %v1622
    %1751 = vst [vmem:[#allocation2 + $0x180] sm:$0xff] %v1623
    %1752 = vst [vmem:[#allocation2 + $0x188] sm:$0xff] %v1624
    %1753 = vst [vmem:[#allocation2 + $0x190] sm:$0xff] %v1625
    %1754 = vst [vmem:[#allocation2 + $0x198] sm:$0xff] %v1626
    %1755 = vst [vmem:[#allocation2 + $0x1a0] sm:$0xff] %v1627
    %1756 = vst [vmem:[#allocation2 + $0x1a8] sm:$0xff] %v1628
    %1757 = vst [vmem:[#allocation2 + $0x1b0] sm:$0xff] %v1629
    %1758 = vst [vmem:[#allocation2 + $0x1b8] sm:$0xff] %v1630
    %1759 = vst [vmem:[#allocation2 + $0x1c0] sm:$0xff] %v1631
    %1760 = vst [vmem:[#allocation2 + $0x1c8] sm:$0xff] %v1632
    %1761 = vst [vmem:[#allocation2 + $0x1d0] sm:$0xff] %v1633
    %1762 = vst [vmem:[#allocation2 + $0x1d8] sm:$0xff] %v1634
    %1763 = vst [vmem:[#allocation2 + $0x1e0] sm:$0xff] %v1635
    %1764 = vst [vmem:[#allocation2 + $0x1e8] sm:$0xff] %v1636
    %1765 = vst [vmem:[#allocation2 + $0x1f0] sm:$0xff] %v1637
    %1766 = vst [vmem:[#allocation2 + $0x1f8] sm:$0xff] %v1638
    %1767 = vst [vmem:[#allocation2 + $0x200] sm:$0xff] %v1639
    %1768 = vst [vmem:[#allocation2 + $0x208] sm:$0xff] %v1640
    %1769 = vst [vmem:[#allocation2 + $0x210] sm:$0xff] %v1641
    %1770 = vst [vmem:[#allocation2 + $0x218] sm:$0xff] %v1642
    %1771 = vst [vmem:[#allocation2 + $0x220] sm:$0xff] %v1643
    %1772 = vst [vmem:[#allocation2 + $0x228] sm:$0xff] %v1644
    %1773 = vst [vmem:[#allocation2 + $0x230] sm:$0xff] %v1645
    %1774 = vst [vmem:[#allocation2 + $0x238] sm:$0xff] %v1646
    %1775 = vst [vmem:[#allocation2 + $0x240] sm:$0xff] %v1647
    %1776 = vst [vmem:[#allocation2 + $0x248] sm:$0xff] %v1648
    %1777 = vst [vmem:[#allocation2 + $0x250] sm:$0xff] %v1649
    %1778 = vst [vmem:[#allocation2 + $0x258] sm:$0xff] %v1650
    %1779 = vst [vmem:[#allocation2 + $0x260] sm:$0xff] %v1651
    %1780 = vst [vmem:[#allocation2 + $0x268] sm:$0xff] %v1652
    %1781 = vst [vmem:[#allocation2 + $0x270] sm:$0xff] %v1653
    %1782 = vst [vmem:[#allocation2 + $0x278] sm:$0xff] %v1654
    %1783 = vst [vmem:[#allocation2 + $0x280] sm:$0xff] %v1655
    %1784 = vst [vmem:[#allocation2 + $0x288] sm:$0xff] %v1656
    %1785 = vst [vmem:[#allocation2 + $0x290] sm:$0xff] %v1657
    %1786 = vst [vmem:[#allocation2 + $0x298] sm:$0xff] %v1658
    %1787 = vst [vmem:[#allocation2 + $0x2a0] sm:$0xff] %v1659
    %1788 = vst [vmem:[#allocation2 + $0x2a8] sm:$0xff] %v1660
    %1789 = vst [vmem:[#allocation2 + $0x2b0] sm:$0xff] %v1661
    %1790 = vst [vmem:[#allocation2 + $0x2b8] sm:$0xff] %v1662
    %1791 = vst [vmem:[#allocation2 + $0x2c0] sm:$0xff] %v1663
    %1792 = vst [vmem:[#allocation2 + $0x2c8] sm:$0xff] %v1664
    %1793 = vst [vmem:[#allocation2 + $0x2d0] sm:$0xff] %v1665
    %1794 = vst [vmem:[#allocation2 + $0x2d8] sm:$0xff] %v1666
    %1795 = vst [vmem:[#allocation2 + $0x2e0] sm:$0xff] %v1667
    %1796 = vst [vmem:[#allocation2 + $0x2e8] sm:$0xff] %v1668
    %1797 = vst [vmem:[#allocation2 + $0x2f0] sm:$0xff] %v1669
    %1798 = vst [vmem:[#allocation2 + $0x2f8] sm:$0xff] %v1670
    %1799 = vst [vmem:[#allocation2 + $0x300] sm:$0xff] %v1671
    %1800 = vst [vmem:[#allocation2 + $0x308] sm:$0xff] %v1672
    %1801 = vst [vmem:[#allocation2 + $0x310] sm:$0xff] %v1673
    %1802 = vst [vmem:[#allocation2 + $0x318] sm:$0xff] %v1674
    %1803 = vst [vmem:[#allocation2 + $0x320] sm:$0xff] %v1675
    %1804 = vst [vmem:[#allocation2 + $0x328] sm:$0xff] %v1676
    %1805 = vst [vmem:[#allocation2 + $0x330] sm:$0xff] %v1677
    %1806 = vst [vmem:[#allocation2 + $0x338] sm:$0xff] %v1678
    %1807 = vst [vmem:[#allocation2 + $0x340] sm:$0xff] %v1679
    %1808 = vst [vmem:[#allocation2 + $0x348] sm:$0xff] %v1680
    %1809 = vst [vmem:[#allocation2 + $0x350] sm:$0xff] %v1681
    %1810 = vst [vmem:[#allocation2 + $0x358] sm:$0xff] %v1682
    %1811 = vst [vmem:[#allocation2 + $0x360] sm:$0xff] %v1683
    %1812 = vst [vmem:[#allocation2 + $0x368] sm:$0xff] %v1684
    %1813 = vst [vmem:[#allocation2 + $0x370] sm:$0xff] %v1685
    %1814 = vst [vmem:[#allocation2 + $0x378] sm:$0xff] %v1686
    %1815 = vst [vmem:[#allocation2 + $0x380] sm:$0xff] %v1687
    %1816 = vst [vmem:[#allocation2 + $0x388] sm:$0xff] %v1688
    %1817 = vst [vmem:[#allocation2 + $0x390] sm:$0xff] %v1689
    %1818 = vst [vmem:[#allocation2 + $0x398] sm:$0xff] %v1690
    %1819 = vst [vmem:[#allocation2 + $0x3a0] sm:$0xff] %v1691
    %1820 = vst [vmem:[#allocation2 + $0x3a8] sm:$0xff] %v1692
    %1821 = vst [vmem:[#allocation2 + $0x3b0] sm:$0xff] %v1693
    %1822 = vst [vmem:[#allocation2 + $0x3b8] sm:$0xff] %v1694
    %1823 = vst [vmem:[#allocation2 + $0x3c0] sm:$0xff] %v1695
    %1824 = vst [vmem:[#allocation2 + $0x3c8] sm:$0xff] %v1696
    %1825 = vst [vmem:[#allocation2 + $0x3d0] sm:$0xff] %v1697
    %1826 = vst [vmem:[#allocation2 + $0x3d8] sm:$0xff] %v1698
    %1827 = vst [vmem:[#allocation2 + $0x3e0] sm:$0xff] %v1699
    %1828 = vst [vmem:[#allocation2 + $0x3e8] sm:$0xff] %v1700
    %1829 = vst [vmem:[#allocation2 + $0x3f0] sm:$0xff] %v1701
    %1830 = vst [vmem:[#allocation2 + $0x3f8] sm:$0xff] %v1702
    // Predicated region
    $region18: #{tpu_custom_call.1} parent=1 // pred_check
      _
    $region19: #{tpu_custom_call.1} parent=1 // pred_check_branch
      %1832 = sbr.rel (0) target = $region21
    $region20: #{tpu_custom_call.1} parent=1 // pred_region
      %s1834 = ssub.s32 16384, 16384
      %1835 = vsyncadd [#allocation3], %s1834
      %s1836 = sshll.u32 [#allocation2], 4
      %s1837 = int_to_ptr.vmem [resolvable:$true] %s1836
      %1842 = dma.vmem_to_hbm [thread:$0]  %s1837, 16384, %s4, [#allocation3], 128, 128, 8
    $region21: #{tpu_custom_call.1} parent=1 // pred_fallthru
      _
    // Predicated region
    $region22: #{tpu_custom_call.1} parent=1 // pred_check
      _
    $region23: #{tpu_custom_call.1} parent=1 // pred_check_branch
      %1844 = sbr.rel (0) target = $region25
    $region24: #{tpu_custom_call.1} parent=1 // pred_region
      %1845 = dma.done [#allocation3], 16384
    $region25: #{tpu_custom_call.1} parent=1 // pred_fallthru
      _
    %1846 = vsyncpa [#allocation3], 1

</llo_original>
